<compile_context>
chip_gen: v7x
topology: tpu7x:2x2x1
jax: 0.10.0
libtpu: 0.0.40
codegen_flags: <defaults>
</compile_context>

<pallas_src>
import math

import jax
import jax.numpy as jnp
from jax.experimental import pallas as pl
from jax.experimental.pallas import tpu as pltpu

_COLS = 1024            # slab width: 8 x 128 lanes (lane-dense, unmasked stores)
_MAX_BLOCK_ROWS = 256   # 256 x 1024 x 4 B = 1 MiB per f32 block per array


def _round_up(x: int, m: int) -> int:
    return (x + m - 1) // m * m


def _to_slab(x_flat):
    """Zero-pad a flat array and view it as a lane-dense [rows, _COLS] slab.

    Returns (slab, block_rows, num_blocks). Zero padding does not change the
    sum of squares and the padded tail is discarded after the mix.
    When the length already divides the slab, reshape is a free view.
    """
    n = x_flat.shape[0]
    rows = -(-n // _COLS)
    block_rows = min(_MAX_BLOCK_ROWS, _round_up(rows, 8))
    num_blocks = -(-rows // block_rows)
    rows_p = num_blocks * block_rows
    pad = rows_p * _COLS - n
    if pad:
        x_flat = jnp.pad(x_flat, (0, pad))
    return x_flat.reshape(rows_p, _COLS), block_rows, num_blocks


# ---------------- sum-of-squares reduction kernel (pass 1) ----------------

def _ssq_kernel(x_ref, o_ref):
    @pl.when(pl.program_id(0) == 0)
    def _():
        o_ref[...] = jnp.zeros_like(o_ref)

    x = x_ref[...].astype(jnp.float32)
    o_ref[...] += jnp.sum(x * x)


def _sum_squares(x):
    slab, block_rows, num_blocks = _to_slab(x.reshape(-1))
    out = pl.pallas_call(
        _ssq_kernel,
        out_shape=jax.ShapeDtypeStruct((1, 1), jnp.float32),
        grid=(num_blocks,),
        in_specs=[pl.BlockSpec((block_rows, _COLS), lambda i: (i, 0))],
        out_specs=pl.BlockSpec((1, 1), lambda i: (0, 0)),
        compiler_params=pltpu.CompilerParams(
            dimension_semantics=("arbitrary",)),
    )(slab)
    return out[0, 0]


# --------------------- elementwise mix kernel (pass 2) ---------------------

def _mix_kernel(scale_ref, w_ref, n_ref, o_ref):
    scale = scale_ref[0]                         # runtime scalar from SMEM
    w = w_ref[...].astype(jnp.float32)
    n = n_ref[...].astype(jnp.float32)
    o_ref[...] = ((scale * w + n) * 0.5).astype(o_ref.dtype)


def _mix_slabs(w_slab, n_slab, scale, block_rows, num_blocks, out_dtype):
    return pl.pallas_call(
        _mix_kernel,
        out_shape=jax.ShapeDtypeStruct(w_slab.shape, out_dtype),
        grid=(num_blocks,),
        in_specs=[
            pl.BlockSpec(memory_space=pltpu.MemorySpace.SMEM),   # scale (1,)
            pl.BlockSpec((block_rows, _COLS), lambda i: (i, 0)),  # waveform
            pl.BlockSpec((block_rows, _COLS), lambda i: (i, 0)),  # noise
        ],
        out_specs=pl.BlockSpec((block_rows, _COLS), lambda i: (i, 0)),
        compiler_params=pltpu.CompilerParams(
            dimension_semantics=("parallel",)),
    )(scale, w_slab, n_slab)


# -------------------------------- wrapper ----------------------------------

def background_noise(waveform: jax.Array, noise: jax.Array, snr_db=20) -> jax.Array:
    """JAX/Pallas equivalent of BackgroundNoise.forward(waveform, noise)."""
    C, T = waveform.shape
    nt = noise.shape[1]

    # --- static shape glue (matches the torch cat / slice exactly) ---
    noise1 = noise[:1]
    if nt < T:
        noise1 = jnp.concatenate(
            [noise1, jnp.zeros((1, T - nt), dtype=noise.dtype)], axis=-1)
    noise1 = noise1[:1, :T]

    # --- pass 1: global L2 norms via tiled Pallas reductions ---
    ss_w = _sum_squares(waveform)
    ss_n = _sum_squares(noise1)

    # scale = exp(snr_db/10) * ||noise|| / ||waveform||  (rsqrt -> EUP, no divide)
    scale_const = jnp.exp(jnp.asarray(snr_db, jnp.float32) / 10.0)
    scale = (scale_const * jnp.sqrt(ss_n) * jax.lax.rsqrt(ss_w)).astype(jnp.float32)
    scale = scale.reshape(1)

    # noise row broadcast over channels (free view for mono audio)
    if C == 1:
        noise_full = noise1
    else:
        noise_full = jnp.broadcast_to(noise1, (C, T))

    # --- pass 2: tiled, double-buffered elementwise mix over lane-dense slabs ---
    w_slab, block_rows, num_blocks = _to_slab(waveform.reshape(-1))
    n_slab, _, _ = _to_slab(noise_full.reshape(-1))

    out_slab = _mix_slabs(w_slab, n_slab, scale, block_rows, num_blocks,
                          waveform.dtype)
    return out_slab.reshape(-1)[: C * T].reshape(C, T)


def _reference(waveform, noise, snr_db=20):
    """Pure-JAX reference mirroring the torch code."""
    C, T = waveform.shape
    nt = noise.shape[1]
    n = noise[:1]
    if nt < T:
        n = jnp.concatenate([n, jnp.zeros((1, T - nt), noise.dtype)], axis=-1)
    n = n[:1, :T]
    scale = math.exp(snr_db / 10.0) * jnp.linalg.norm(n) / jnp.linalg.norm(waveform)
    return (scale * waveform + n) / 2


if __name__ == "__main__":
    key = jax.random.PRNGKey(0)
    k1, k2, k3, k4 = jax.random.split(key, 4)

    bn = jax.jit(background_noise)

    # Case 1: mono audio, noise of the same length.
    # Slab is an exact (512, 1024) view -> 2 blocks of 256x1024, no padding.
    T1 = 512 * 1024
    w1 = jax.random.normal(k1, (1, T1), dtype=jnp.float32)
    n1 = 0.1 * jax.random.normal(k2, (1, T1), dtype=jnp.float32)
    out1 = jax.block_until_ready(bn(w1, n1, 20))
    ref1 = _reference(w1, n1, 20)
    assert out1.shape == ref1.shape and out1.dtype == ref1.dtype
    assert jnp.allclose(out1, ref1, rtol=1e-4, atol=1e-4)

    # Case 2: stereo waveform with a shorter noise clip.
    # Exercises the zero-pad glue, channel broadcast and slab tail padding.
    w2 = jax.random.normal(k3, (2, 30000), dtype=jnp.float32)
    n2 = 0.1 * jax.random.normal(k4, (1, 17000), dtype=jnp.float32)
    out2 = jax.block_until_ready(bn(w2, n2, 20))
    ref2 = _reference(w2, n2, 20)
    assert out2.shape == ref2.shape and out2.dtype == ref2.dtype
    assert jnp.allclose(out2, ref2, rtol=1e-4, atol=1e-4)

    print("KERNEL_OK")
</pallas_src>

<mosaic_0001>
module attributes {stable_mosaic.version = 11 : i64} {
  func.func @_ssq_kernel(%arg0: i32, %arg1: memref<256x1024xf32, #tpu.memory_space<vmem>>, %arg2: memref<1x1xf32, #tpu.memory_space<vmem>>) attributes {dimension_semantics = [#tpu.dimension_semantics<arbitrary>], iteration_bounds = array<i64: 2>, scalar_prefetch = 0 : i64, scratch_operands = 0 : i64, tpu.core_type = #tpu.core_type<tc>, window_params = [{transform_indices = @transform_0, window_bounds = array<i64: 256, 1024>}, {pipeline_mode = #tpu.pipeline_mode<synchronous>, transform_indices = @transform_1, window_bounds = array<i64: 1, 1>}]} {
    %c0_i32 = arith.constant 0 : i32
    %0 = arith.cmpi eq, %arg0, %c0_i32 : i32
    %1 = arith.extui %0 : i1 to i32
    %c0_i32_0 = arith.constant 0 : i32
    %2 = arith.cmpi ne, %1, %c0_i32_0 : i32
    scf.if %2 {
      %cst_6 = arith.constant 0.000000e+00 : f32
      %13 = vector.broadcast %cst_6 : f32 to vector<1x1xf32>
      %c0_7 = arith.constant 0 : index
      %c0_8 = arith.constant 0 : index
      %14 = vector.load %arg2[%c0_7, %c0_8] : memref<1x1xf32, #tpu.memory_space<vmem>>, vector<1x1xf32>
      tpu.vector_store %arg2[%c0_7, %c0_8], %13 {strides = array<i32>} : memref<1x1xf32, #tpu.memory_space<vmem>>, vector<1x1xf32>,
    } else {
    }
    %c0 = arith.constant 0 : index
    %c0_1 = arith.constant 0 : index
    %3 = vector.load %arg1[%c0, %c0_1] : memref<256x1024xf32, #tpu.memory_space<vmem>>, vector<256x1024xf32>
    %c0_2 = arith.constant 0 : index
    %c0_3 = arith.constant 0 : index
    %4 = vector.load %arg2[%c0_2, %c0_3] : memref<1x1xf32, #tpu.memory_space<vmem>>, vector<1x1xf32>
    %5 = arith.mulf %3, %3 : vector<256x1024xf32>
    %6 = vector.shape_cast %5 : vector<256x1024xf32> to vector<1x256x1024xf32>
    %cst = arith.constant dense<0.000000e+00> : vector<1xf32>
    %7 = vector.multi_reduction <add>, %6, %cst [1, 2] : vector<1x256x1024xf32> to vector<1xf32>
    %8 = vector.shape_cast %7 : vector<1xf32> to vector<1x1x1xf32>
    %9 = vector.extract %8[0, 0, 0] : f32 from vector<1x1x1xf32>
    %10 = vector.broadcast %9 : f32 to vector<1x1xf32>
    %11 = arith.addf %4, %10 : vector<1x1xf32>
    %c0_4 = arith.constant 0 : index
    %c0_5 = arith.constant 0 : index
    %12 = vector.load %arg2[%c0_4, %c0_5] : memref<1x1xf32, #tpu.memory_space<vmem>>, vector<1x1xf32>
    tpu.vector_store %arg2[%c0_4, %c0_5], %11 {strides = array<i32>} : memref<1x1xf32, #tpu.memory_space<vmem>>, vector<1x1xf32>,
    return
  }
  func.func @transform_0(%arg0: i32) -> (i32, i32) {
    %c0_i32 = arith.constant 0 : i32
    %c0_i32_0 = arith.constant 0 : i32
    return %arg0, %c0_i32 : i32, i32
  }
  func.func @transform_1(%arg0: i32) -> (i32, i32) {
    %c0_i32 = arith.constant 0 : i32
    %c0_i32_0 = arith.constant 0 : i32
    %c0_i32_1 = arith.constant 0 : i32
    return %c0_i32, %c0_i32_0 : i32, i32
  }
}

module attributes {stable_mosaic.version = 11 : i64} {
  func.func @_mix_kernel(%arg0: i32, %arg1: memref<1xf32, #tpu.memory_space<smem>>, %arg2: memref<256x1024xf32, #tpu.memory_space<vmem>>, %arg3: memref<256x1024xf32, #tpu.memory_space<vmem>>, %arg4: memref<256x1024xf32, #tpu.memory_space<vmem>>) attributes {dimension_semantics = [#tpu.dimension_semantics<parallel>], iteration_bounds = array<i64: 2>, scalar_prefetch = 0 : i64, scratch_operands = 0 : i64, tpu.core_type = #tpu.core_type<tc>, window_params = [{transform_indices = @transform_0, window_bounds = array<i64: 1>}, {transform_indices = @transform_1, window_bounds = array<i64: 256, 1024>}, {transform_indices = @transform_2, window_bounds = array<i64: 256, 1024>}, {transform_indices = @transform_3, window_bounds = array<i64: 256, 1024>}]} {
    %c0 = arith.constant 0 : index
    %0 = memref.load %arg1[%c0] : memref<1xf32, #tpu.memory_space<smem>>
    %c0_0 = arith.constant 0 : index
    %c0_1 = arith.constant 0 : index
    %1 = vector.load %arg2[%c0_0, %c0_1] : memref<256x1024xf32, #tpu.memory_space<vmem>>, vector<256x1024xf32>
    %c0_2 = arith.constant 0 : index
    %c0_3 = arith.constant 0 : index
    %2 = vector.load %arg3[%c0_2, %c0_3] : memref<256x1024xf32, #tpu.memory_space<vmem>>, vector<256x1024xf32>
    %3 = vector.broadcast %0 : f32 to vector<256x1024xf32>
    %4 = arith.mulf %3, %1 : vector<256x1024xf32>
    %5 = arith.addf %4, %2 : vector<256x1024xf32>
    %cst = arith.constant 5.000000e-01 : f32
    %6 = vector.broadcast %cst : f32 to vector<256x1024xf32>
    %7 = arith.mulf %5, %6 : vector<256x1024xf32>
    %c0_4 = arith.constant 0 : index
    %c0_5 = arith.constant 0 : index
    %8 = vector.load %arg4[%c0_4, %c0_5] : memref<256x1024xf32, #tpu.memory_space<vmem>>, vector<256x1024xf32>
    tpu.vector_store %arg4[%c0_4, %c0_5], %7 {strides = array<i32>} : memref<256x1024xf32, #tpu.memory_space<vmem>>, vector<256x1024xf32>,
    return
  }
  func.func @transform_0(%arg0: i32) -> i32 {
    %c0_i32 = arith.constant 0 : i32
    %c0_i32_0 = arith.constant 0 : i32
    return %c0_i32 : i32
  }
  func.func @transform_1(%arg0: i32) -> (i32, i32) {
    %c0_i32 = arith.constant 0 : i32
    %c0_i32_0 = arith.constant 0 : i32
    return %arg0, %c0_i32 : i32, i32
  }
  func.func @transform_2(%arg0: i32) -> (i32, i32) {
    %c0_i32 = arith.constant 0 : i32
    %c0_i32_0 = arith.constant 0 : i32
    return %arg0, %c0_i32 : i32, i32
  }
  func.func @transform_3(%arg0: i32) -> (i32, i32) {
    %c0_i32 = arith.constant 0 : i32
    %c0_i32_0 = arith.constant 0 : i32
    return %arg0, %c0_i32 : i32, i32
  }
}

</mosaic_0001>

<llo_original>
// kernel: background_noise.4
$region0: #{background_noise.4}
  #allocation0 [shape = 'u32[]', space=smem, size = 0x4, offset = 0x4, fixed_abs, tag = 'smem constant byte address 0x4 - core index']
  #allocation1 [shape = 'u32[144,128]{1,0:T(1,128)}', space=vmem, size = 0x12000, scoped, tag = 'internal scratch']
  %s0 = inlined_call_operand.vmem [shape: f32[512,1024], index: 0, kind: input, shape index: {}]
  %s1 = inlined_call_operand.hbm [shape: f32[1,1], index: 1, kind: output, shape index: {}]
  %s2 = sld [smem:[#allocation0]]
  $region41: #{background_noise.4} parent=0
    _
  %s4 = ssub.s32 1, %s2
  %s5 = scalar_select 0, %s4, %s2
  $region1: #{background_noise.4} parent=0
    #allocation2 [shape = 'u8[512]{0}', space=vmem, size = 0x400, scoped, tag = 'output window, operand 0, single buffered']
    #allocation3 [shape = 's32[2]{0}', space=sflag, size = 0x8, scoped, tag = 'scoped memory for background_noise.4']
    %6 = vsyncpa [#allocation3], 0
    loop: start=0, step=1, limit=4
    $region2: #{background_noise.4} parent=1 // loop_pre_header
      _
    $region3: #{background_noise.4} parent=1 // loop_header
      %s8 = sphi 0, %s12
      %p9 = scmp.ge.s32.totalorder %s8, 4
      %s18 = sphi 0, %s20
      %s21 = sphi 0, %s18
      %s22 = sphi 0, %s21
      %s38 = sphi 0, %s22
      %s42 = sphi 0, %s42
      %s44 = sphi 0, %s42
      %s45 = sphi 0, %s44
      %s59 = sphi 0, %s45
    $region4: #{background_noise.4} parent=1 // loop_header_branch
      %11 = sbr.rel (%p9) target = $region8
    $region5: #{background_noise.4} parent=1 // loop_body
      %s13 = ssub.s32 %s8, 1
      %s14 = ssub.s32 %s8, 2
      %s15 = sadd.s32 %s8, 1
      %s16 = ssub.s32 %s8, %s15
      %p17 = scmp.eq.s32.totalorder %s16, 0
      %s19 = sadd.s32 %s18, 1
      %s20 = scalar_select %p17, %s18, %s19
      %p23 = pneg %p17
      %p24 = scmp.eq.s32.totalorder %s8, 1
      %p25 = por %p23, %p24
      %p26 = scmp.ne.s32.totalorder %s18, %s21
      %p27 = scmp.eq.s32.totalorder %s8, 0
      %p28 = por %p26, %p27
      %p29 = scmp.ne.s32.totalorder %s18, %s21
      %p30 = scmp.eq.s32.totalorder %s13, 1
      %p31 = por %p29, %p30
      %p32 = scmp.ne.s32.totalorder %s21, %s22
      %p33 = scmp.eq.s32.totalorder %s13, 0
      %p34 = por %p32, %p33
      %p35 = scmp.ne.s32.totalorder %s21, %s22
      %p36 = scmp.eq.s32.totalorder %s14, 1
      %p37 = por %p35, %p36
      %p39 = scmp.ne.s32.totalorder %s22, %s38
      %p40 = scmp.eq.s32.totalorder %s14, 0
      %p41 = por %p39, %p40
      %s43 = sadd.s32 %s42, 1
      %p46 = scmp.eq.s32.totalorder %s8, 1
      %p47 = scmp.ne.s32.totalorder %s42, %s44
      %p48 = scmp.eq.s32.totalorder %s8, 0
      %p49 = por %p47, %p48
      %p50 = scmp.ne.s32.totalorder %s42, %s44
      %p51 = scmp.eq.s32.totalorder %s13, 1
      %p52 = por %p50, %p51
      %p53 = scmp.ne.s32.totalorder %s44, %s45
      %p54 = scmp.eq.s32.totalorder %s13, 0
      %p55 = por %p53, %p54
      %p56 = scmp.ne.s32.totalorder %s44, %s45
      %p57 = scmp.eq.s32.totalorder %s14, 1
      %p58 = por %p56, %p57
      %p60 = scmp.ne.s32.totalorder %s45, %s59
      %p61 = scmp.eq.s32.totalorder %s14, 0
      %p62 = por %p60, %p61
      %p63 = scmp.le.s32.totalorder 1, %s8
      %p64 = scmp.lt.s32.totalorder %s8, 3
      %p65 = pnand %p63, %p64
      %p66 = pneg %p65
      // Predicated region
      $region9: #{background_noise.4} parent=5 // pred_check
        _
      $region10: #{background_noise.4} parent=5 // pred_check_branch
        %68 = sbr.rel (%p65) target = $region12
      $region11: #{background_noise.4} parent=5 // pred_region
        %s69 = ssub.s32 %s8, 1
      $region12: #{background_noise.4} parent=5 // pred_fallthru
        _
      %p70 = scmp.lt.s32.totalorder %s8, 2
      // Predicated region
      $region13: #{background_noise.4} parent=5 // pred_check
        %p71 = pneg %p70
      $region14: #{background_noise.4} parent=5 // pred_check_branch
        %73 = sbr.rel (%p71) target = $region16
      $region15: #{background_noise.4} parent=5 // pred_region
        // Predicated region
        $region17: #{background_noise.4} parent=15 // pred_check
          %p74 = pneg %p28
        $region18: #{background_noise.4} parent=15 // pred_check_branch
          %76 = sbr.rel (%p74) target = $region20
        $region19: #{background_noise.4} parent=15 // pred_region
          %s77 = smul.u32 32, %s8
          %p78 = scmp.lt.s32.totalorder %s77, 63
          %s79 = scalar_select %p78, %s77, 63
          %s80 = smul.addr %s79, 8
          %s81 = smul.addr %s80, 8
          %s82 = scalar_lea.vmem %s0, %s81
          %s83 = smul.u32 32, %s8
        $region20: #{background_noise.4} parent=15 // pred_fallthru
          _
      $region16: #{background_noise.4} parent=5 // pred_fallthru
        _
      %p84 = scmp.le.s32.totalorder 1, %s8
      %p85 = scmp.lt.s32.totalorder %s8, 3
      %p86 = pnand %p84, %p85
      %p87 = pneg %p86
      // Predicated region
      $region21: #{background_noise.4} parent=5 // pred_check
        _
      $region22: #{background_noise.4} parent=5 // pred_check_branch
        %89 = sbr.rel (%p86) target = $region24
      $region23: #{background_noise.4} parent=5 // pred_region
        %s90 = ssub.s32 %s8, 1
        %s91 = smul.u32 32, %s13
        %p92 = scmp.lt.s32.totalorder %s91, 63
        %s93 = scalar_select %p92, %s91, 63
        %s94 = smul.addr %s93, 8
        %s95 = smul.addr %s94, 8
        %s96 = scalar_lea.vmem %s0, %s95
        %p97 = pneg %p34
        %p98 = pneg %p31
        %p99 = pneg %p55
        %p100 = pneg %p52
        %s101 = smul.u32 32, %s13
        %p102 = scmp.lt.s32.totalorder %s101, 63
        %s103 = scalar_select %p102, %s101, 63
        %s104 = smul.addr %s103, 8
        %s105 = smul.addr %s104, 8
        %s106 = scalar_lea.vmem %s0, %s105
        %s107 = smul.u32 32, %s13
        %p108 = scmp.eq.s32.totalorder %s13, 0
        // Predicated region
        $region25: #{background_noise.4} parent=23 // pred_check
          %p109 = pneg %p108
        $region26: #{background_noise.4} parent=23 // pred_check_branch
          %111 = sbr.rel (%p109) target = $region28
        $region27: #{background_noise.4} parent=23 // pred_region
          %vm112 = vcmask 0
          %113 = vst.msk [vmem:[#allocation2] sm:$0x1] %vm112, 0.0
        $region28: #{background_noise.4} parent=23 // pred_fallthru
          _
        %v114 = vld [vmem:[%s106] sm:$0xff]
        %v115 = vld [vmem:[%s106 + $0x8] sm:$0xff]
        %v116 = vld [vmem:[%s106 + $0x10] sm:$0xff]
        %v117 = vld [vmem:[%s106 + $0x18] sm:$0xff]
        %v118 = vld [vmem:[%s106 + $0x20] sm:$0xff]
        %v119 = vld [vmem:[%s106 + $0x28] sm:$0xff]
        %v120 = vld [vmem:[%s106 + $0x30] sm:$0xff]
        %v121 = vld [vmem:[%s106 + $0x38] sm:$0xff]
        %v122 = vld [vmem:[%s106 + $0x40] sm:$0xff]
        %v123 = vld [vmem:[%s106 + $0x48] sm:$0xff]
        %v124 = vld [vmem:[%s106 + $0x50] sm:$0xff]
        %v125 = vld [vmem:[%s106 + $0x58] sm:$0xff]
        %v126 = vld [vmem:[%s106 + $0x60] sm:$0xff]
        %v127 = vld [vmem:[%s106 + $0x68] sm:$0xff]
        %v128 = vld [vmem:[%s106 + $0x70] sm:$0xff]
        %v129 = vld [vmem:[%s106 + $0x78] sm:$0xff]
        %v130 = vld [vmem:[%s106 + $0x80] sm:$0xff]
        %v131 = vld [vmem:[%s106 + $0x88] sm:$0xff]
        %v132 = vld [vmem:[%s106 + $0x90] sm:$0xff]
        %v133 = vld [vmem:[%s106 + $0x98] sm:$0xff]
        %v134 = vld [vmem:[%s106 + $0xa0] sm:$0xff]
        %v135 = vld [vmem:[%s106 + $0xa8] sm:$0xff]
        %v136 = vld [vmem:[%s106 + $0xb0] sm:$0xff]
        %v137 = vld [vmem:[%s106 + $0xb8] sm:$0xff]
        %v138 = vld [vmem:[%s106 + $0xc0] sm:$0xff]
        %v139 = vld [vmem:[%s106 + $0xc8] sm:$0xff]
        %v140 = vld [vmem:[%s106 + $0xd0] sm:$0xff]
        %v141 = vld [vmem:[%s106 + $0xd8] sm:$0xff]
        %v142 = vld [vmem:[%s106 + $0xe0] sm:$0xff]
        %v143 = vld [vmem:[%s106 + $0xe8] sm:$0xff]
        %v144 = vld [vmem:[%s106 + $0xf0] sm:$0xff]
        %v145 = vld [vmem:[%s106 + $0xf8] sm:$0xff]
        %v146 = vld [vmem:[%s106 + $0x100] sm:$0xff]
        %v147 = vld [vmem:[%s106 + $0x108] sm:$0xff]
        %v148 = vld [vmem:[%s106 + $0x110] sm:$0xff]
        %v149 = vld [vmem:[%s106 + $0x118] sm:$0xff]
        %v150 = vld [vmem:[%s106 + $0x120] sm:$0xff]
        %v151 = vld [vmem:[%s106 + $0x128] sm:$0xff]
        %v152 = vld [vmem:[%s106 + $0x130] sm:$0xff]
        %v153 = vld [vmem:[%s106 + $0x138] sm:$0xff]
        %v154 = vld [vmem:[%s106 + $0x140] sm:$0xff]
        %v155 = vld [vmem:[%s106 + $0x148] sm:$0xff]
        %v156 = vld [vmem:[%s106 + $0x150] sm:$0xff]
        %v157 = vld [vmem:[%s106 + $0x158] sm:$0xff]
        %v158 = vld [vmem:[%s106 + $0x160] sm:$0xff]
        %v159 = vld [vmem:[%s106 + $0x168] sm:$0xff]
        %v160 = vld [vmem:[%s106 + $0x170] sm:$0xff]
        %v161 = vld [vmem:[%s106 + $0x178] sm:$0xff]
        %v162 = vld [vmem:[%s106 + $0x180] sm:$0xff]
        %v163 = vld [vmem:[%s106 + $0x188] sm:$0xff]
        %v164 = vld [vmem:[%s106 + $0x190] sm:$0xff]
        %v165 = vld [vmem:[%s106 + $0x198] sm:$0xff]
        %v166 = vld [vmem:[%s106 + $0x1a0] sm:$0xff]
        %v167 = vld [vmem:[%s106 + $0x1a8] sm:$0xff]
        %v168 = vld [vmem:[%s106 + $0x1b0] sm:$0xff]
        %v169 = vld [vmem:[%s106 + $0x1b8] sm:$0xff]
        %v170 = vld [vmem:[%s106 + $0x1c0] sm:$0xff]
        %v171 = vld [vmem:[%s106 + $0x1c8] sm:$0xff]
        %v172 = vld [vmem:[%s106 + $0x1d0] sm:$0xff]
        %v173 = vld [vmem:[%s106 + $0x1d8] sm:$0xff]
        %v174 = vld [vmem:[%s106 + $0x1e0] sm:$0xff]
        %v175 = vld [vmem:[%s106 + $0x1e8] sm:$0xff]
        %v176 = vld [vmem:[%s106 + $0x1f0] sm:$0xff]
        %v177 = vld [vmem:[%s106 + $0x1f8] sm:$0xff]
        %v178 = vld [vmem:[%s106 + $0x200] sm:$0xff]
        %v179 = vld [vmem:[%s106 + $0x208] sm:$0xff]
        %v180 = vld [vmem:[%s106 + $0x210] sm:$0xff]
        %v181 = vld [vmem:[%s106 + $0x218] sm:$0xff]
        %v182 = vld [vmem:[%s106 + $0x220] sm:$0xff]
        %v183 = vld [vmem:[%s106 + $0x228] sm:$0xff]
        %v184 = vld [vmem:[%s106 + $0x230] sm:$0xff]
        %v185 = vld [vmem:[%s106 + $0x238] sm:$0xff]
        %v186 = vld [vmem:[%s106 + $0x240] sm:$0xff]
        %v187 = vld [vmem:[%s106 + $0x248] sm:$0xff]
        %v188 = vld [vmem:[%s106 + $0x250] sm:$0xff]
        %v189 = vld [vmem:[%s106 + $0x258] sm:$0xff]
        %v190 = vld [vmem:[%s106 + $0x260] sm:$0xff]
        %v191 = vld [vmem:[%s106 + $0x268] sm:$0xff]
        %v192 = vld [vmem:[%s106 + $0x270] sm:$0xff]
        %v193 = vld [vmem:[%s106 + $0x278] sm:$0xff]
        %v194 = vld [vmem:[%s106 + $0x280] sm:$0xff]
        %v195 = vld [vmem:[%s106 + $0x288] sm:$0xff]
        %v196 = vld [vmem:[%s106 + $0x290] sm:$0xff]
        %v197 = vld [vmem:[%s106 + $0x298] sm:$0xff]
        %v198 = vld [vmem:[%s106 + $0x2a0] sm:$0xff]
        %v199 = vld [vmem:[%s106 + $0x2a8] sm:$0xff]
        %v200 = vld [vmem:[%s106 + $0x2b0] sm:$0xff]
        %v201 = vld [vmem:[%s106 + $0x2b8] sm:$0xff]
        %v202 = vld [vmem:[%s106 + $0x2c0] sm:$0xff]
        %v203 = vld [vmem:[%s106 + $0x2c8] sm:$0xff]
        %v204 = vld [vmem:[%s106 + $0x2d0] sm:$0xff]
        %v205 = vld [vmem:[%s106 + $0x2d8] sm:$0xff]
        %v206 = vld [vmem:[%s106 + $0x2e0] sm:$0xff]
        %v207 = vld [vmem:[%s106 + $0x2e8] sm:$0xff]
        %v208 = vld [vmem:[%s106 + $0x2f0] sm:$0xff]
        %v209 = vld [vmem:[%s106 + $0x2f8] sm:$0xff]
        %v210 = vld [vmem:[%s106 + $0x300] sm:$0xff]
        %v211 = vld [vmem:[%s106 + $0x308] sm:$0xff]
        %v212 = vld [vmem:[%s106 + $0x310] sm:$0xff]
        %v213 = vld [vmem:[%s106 + $0x318] sm:$0xff]
        %v214 = vld [vmem:[%s106 + $0x320] sm:$0xff]
        %v215 = vld [vmem:[%s106 + $0x328] sm:$0xff]
        %v216 = vld [vmem:[%s106 + $0x330] sm:$0xff]
        %v217 = vld [vmem:[%s106 + $0x338] sm:$0xff]
        %v218 = vld [vmem:[%s106 + $0x340] sm:$0xff]
        %v219 = vld [vmem:[%s106 + $0x348] sm:$0xff]
        %v220 = vld [vmem:[%s106 + $0x350] sm:$0xff]
        %v221 = vld [vmem:[%s106 + $0x358] sm:$0xff]
        %v222 = vld [vmem:[%s106 + $0x360] sm:$0xff]
        %v223 = vld [vmem:[%s106 + $0x368] sm:$0xff]
        %v224 = vld [vmem:[%s106 + $0x370] sm:$0xff]
        %v225 = vld [vmem:[%s106 + $0x378] sm:$0xff]
        %v226 = vld [vmem:[%s106 + $0x380] sm:$0xff]
        %v227 = vld [vmem:[%s106 + $0x388] sm:$0xff]
        %v228 = vld [vmem:[%s106 + $0x390] sm:$0xff]
        %v229 = vld [vmem:[%s106 + $0x398] sm:$0xff]
        %v230 = vld [vmem:[%s106 + $0x3a0] sm:$0xff]
        %v231 = vld [vmem:[%s106 + $0x3a8] sm:$0xff]
        %v232 = vld [vmem:[%s106 + $0x3b0] sm:$0xff]
        %v233 = vld [vmem:[%s106 + $0x3b8] sm:$0xff]
        %v234 = vld [vmem:[%s106 + $0x3c0] sm:$0xff]
        %v235 = vld [vmem:[%s106 + $0x3c8] sm:$0xff]
        %v236 = vld [vmem:[%s106 + $0x3d0] sm:$0xff]
        %v237 = vld [vmem:[%s106 + $0x3d8] sm:$0xff]
        %v238 = vld [vmem:[%s106 + $0x3e0] sm:$0xff]
        %v239 = vld [vmem:[%s106 + $0x3e8] sm:$0xff]
        %v240 = vld [vmem:[%s106 + $0x3f0] sm:$0xff]
        %v241 = vld [vmem:[%s106 + $0x3f8] sm:$0xff]
        %v242 = vld [vmem:[%s106 + $0x400] sm:$0xff]
        %v243 = vld [vmem:[%s106 + $0x408] sm:$0xff]
        %v244 = vld [vmem:[%s106 + $0x410] sm:$0xff]
        %v245 = vld [vmem:[%s106 + $0x418] sm:$0xff]
        %v246 = vld [vmem:[%s106 + $0x420] sm:$0xff]
        %v247 = vld [vmem:[%s106 + $0x428] sm:$0xff]
        %v248 = vld [vmem:[%s106 + $0x430] sm:$0xff]
        %v249 = vld [vmem:[%s106 + $0x438] sm:$0xff]
        %v250 = vld [vmem:[%s106 + $0x440] sm:$0xff]
        %v251 = vld [vmem:[%s106 + $0x448] sm:$0xff]
        %v252 = vld [vmem:[%s106 + $0x450] sm:$0xff]
        %v253 = vld [vmem:[%s106 + $0x458] sm:$0xff]
        %v254 = vld [vmem:[%s106 + $0x460] sm:$0xff]
        %v255 = vld [vmem:[%s106 + $0x468] sm:$0xff]
        %v256 = vld [vmem:[%s106 + $0x470] sm:$0xff]
        %v257 = vld [vmem:[%s106 + $0x478] sm:$0xff]
        %v258 = vld [vmem:[%s106 + $0x480] sm:$0xff]
        %v259 = vld [vmem:[%s106 + $0x488] sm:$0xff]
        %v260 = vld [vmem:[%s106 + $0x490] sm:$0xff]
        %v261 = vld [vmem:[%s106 + $0x498] sm:$0xff]
        %v262 = vld [vmem:[%s106 + $0x4a0] sm:$0xff]
        %v263 = vld [vmem:[%s106 + $0x4a8] sm:$0xff]
        %v264 = vld [vmem:[%s106 + $0x4b0] sm:$0xff]
        %v265 = vld [vmem:[%s106 + $0x4b8] sm:$0xff]
        %v266 = vld [vmem:[%s106 + $0x4c0] sm:$0xff]
        %v267 = vld [vmem:[%s106 + $0x4c8] sm:$0xff]
        %v268 = vld [vmem:[%s106 + $0x4d0] sm:$0xff]
        %v269 = vld [vmem:[%s106 + $0x4d8] sm:$0xff]
        %v270 = vld [vmem:[%s106 + $0x4e0] sm:$0xff]
        %v271 = vld [vmem:[%s106 + $0x4e8] sm:$0xff]
        %v272 = vld [vmem:[%s106 + $0x4f0] sm:$0xff]
        %v273 = vld [vmem:[%s106 + $0x4f8] sm:$0xff]
        %v274 = vld [vmem:[%s106 + $0x500] sm:$0xff]
        %v275 = vld [vmem:[%s106 + $0x508] sm:$0xff]
        %v276 = vld [vmem:[%s106 + $0x510] sm:$0xff]
        %v277 = vld [vmem:[%s106 + $0x518] sm:$0xff]
        %v278 = vld [vmem:[%s106 + $0x520] sm:$0xff]
        %v279 = vld [vmem:[%s106 + $0x528] sm:$0xff]
        %v280 = vld [vmem:[%s106 + $0x530] sm:$0xff]
        %v281 = vld [vmem:[%s106 + $0x538] sm:$0xff]
        %v282 = vld [vmem:[%s106 + $0x540] sm:$0xff]
        %v283 = vld [vmem:[%s106 + $0x548] sm:$0xff]
        %v284 = vld [vmem:[%s106 + $0x550] sm:$0xff]
        %v285 = vld [vmem:[%s106 + $0x558] sm:$0xff]
        %v286 = vld [vmem:[%s106 + $0x560] sm:$0xff]
        %v287 = vld [vmem:[%s106 + $0x568] sm:$0xff]
        %v288 = vld [vmem:[%s106 + $0x570] sm:$0xff]
        %v289 = vld [vmem:[%s106 + $0x578] sm:$0xff]
        %v290 = vld [vmem:[%s106 + $0x580] sm:$0xff]
        %v291 = vld [vmem:[%s106 + $0x588] sm:$0xff]
        %v292 = vld [vmem:[%s106 + $0x590] sm:$0xff]
        %v293 = vld [vmem:[%s106 + $0x598] sm:$0xff]
        %v294 = vld [vmem:[%s106 + $0x5a0] sm:$0xff]
        %v295 = vld [vmem:[%s106 + $0x5a8] sm:$0xff]
        %v296 = vld [vmem:[%s106 + $0x5b0] sm:$0xff]
        %v297 = vld [vmem:[%s106 + $0x5b8] sm:$0xff]
        %v298 = vld [vmem:[%s106 + $0x5c0] sm:$0xff]
        %v299 = vld [vmem:[%s106 + $0x5c8] sm:$0xff]
        %v300 = vld [vmem:[%s106 + $0x5d0] sm:$0xff]
        %v301 = vld [vmem:[%s106 + $0x5d8] sm:$0xff]
        %v302 = vld [vmem:[%s106 + $0x5e0] sm:$0xff]
        %v303 = vld [vmem:[%s106 + $0x5e8] sm:$0xff]
        %v304 = vld [vmem:[%s106 + $0x5f0] sm:$0xff]
        %v305 = vld [vmem:[%s106 + $0x5f8] sm:$0xff]
        %v306 = vld [vmem:[%s106 + $0x600] sm:$0xff]
        %v307 = vld [vmem:[%s106 + $0x608] sm:$0xff]
        %v308 = vld [vmem:[%s106 + $0x610] sm:$0xff]
        %v309 = vld [vmem:[%s106 + $0x618] sm:$0xff]
        %v310 = vld [vmem:[%s106 + $0x620] sm:$0xff]
        %v311 = vld [vmem:[%s106 + $0x628] sm:$0xff]
        %v312 = vld [vmem:[%s106 + $0x630] sm:$0xff]
        %v313 = vld [vmem:[%s106 + $0x638] sm:$0xff]
        %v314 = vld [vmem:[%s106 + $0x640] sm:$0xff]
        %v315 = vld [vmem:[%s106 + $0x648] sm:$0xff]
        %v316 = vld [vmem:[%s106 + $0x650] sm:$0xff]
        %v317 = vld [vmem:[%s106 + $0x658] sm:$0xff]
        %v318 = vld [vmem:[%s106 + $0x660] sm:$0xff]
        %v319 = vld [vmem:[%s106 + $0x668] sm:$0xff]
        %v320 = vld [vmem:[%s106 + $0x670] sm:$0xff]
        %v321 = vld [vmem:[%s106 + $0x678] sm:$0xff]
        %v322 = vld [vmem:[%s106 + $0x680] sm:$0xff]
        %v323 = vld [vmem:[%s106 + $0x688] sm:$0xff]
        %v324 = vld [vmem:[%s106 + $0x690] sm:$0xff]
        %v325 = vld [vmem:[%s106 + $0x698] sm:$0xff]
        %v326 = vld [vmem:[%s106 + $0x6a0] sm:$0xff]
        %v327 = vld [vmem:[%s106 + $0x6a8] sm:$0xff]
        %v328 = vld [vmem:[%s106 + $0x6b0] sm:$0xff]
        %v329 = vld [vmem:[%s106 + $0x6b8] sm:$0xff]
        %v330 = vld [vmem:[%s106 + $0x6c0] sm:$0xff]
        %v331 = vld [vmem:[%s106 + $0x6c8] sm:$0xff]
        %v332 = vld [vmem:[%s106 + $0x6d0] sm:$0xff]
        %v333 = vld [vmem:[%s106 + $0x6d8] sm:$0xff]
        %v334 = vld [vmem:[%s106 + $0x6e0] sm:$0xff]
        %v335 = vld [vmem:[%s106 + $0x6e8] sm:$0xff]
        %v336 = vld [vmem:[%s106 + $0x6f0] sm:$0xff]
        %v337 = vld [vmem:[%s106 + $0x6f8] sm:$0xff]
        %v338 = vld [vmem:[%s106 + $0x700] sm:$0xff]
        %v339 = vld [vmem:[%s106 + $0x708] sm:$0xff]
        %v340 = vld [vmem:[%s106 + $0x710] sm:$0xff]
        %v341 = vld [vmem:[%s106 + $0x718] sm:$0xff]
        %v342 = vld [vmem:[%s106 + $0x720] sm:$0xff]
        %v343 = vld [vmem:[%s106 + $0x728] sm:$0xff]
        %v344 = vld [vmem:[%s106 + $0x730] sm:$0xff]
        %v345 = vld [vmem:[%s106 + $0x738] sm:$0xff]
        %v346 = vld [vmem:[%s106 + $0x740] sm:$0xff]
        %v347 = vld [vmem:[%s106 + $0x748] sm:$0xff]
        %v348 = vld [vmem:[%s106 + $0x750] sm:$0xff]
        %v349 = vld [vmem:[%s106 + $0x758] sm:$0xff]
        %v350 = vld [vmem:[%s106 + $0x760] sm:$0xff]
        %v351 = vld [vmem:[%s106 + $0x768] sm:$0xff]
        %v352 = vld [vmem:[%s106 + $0x770] sm:$0xff]
        %v353 = vld [vmem:[%s106 + $0x778] sm:$0xff]
        %v354 = vld [vmem:[%s106 + $0x780] sm:$0xff]
        %v355 = vld [vmem:[%s106 + $0x788] sm:$0xff]
        %v356 = vld [vmem:[%s106 + $0x790] sm:$0xff]
        %v357 = vld [vmem:[%s106 + $0x798] sm:$0xff]
        %v358 = vld [vmem:[%s106 + $0x7a0] sm:$0xff]
        %v359 = vld [vmem:[%s106 + $0x7a8] sm:$0xff]
        %v360 = vld [vmem:[%s106 + $0x7b0] sm:$0xff]
        %v361 = vld [vmem:[%s106 + $0x7b8] sm:$0xff]
        %v362 = vld [vmem:[%s106 + $0x7c0] sm:$0xff]
        %v363 = vld [vmem:[%s106 + $0x7c8] sm:$0xff]
        %v364 = vld [vmem:[%s106 + $0x7d0] sm:$0xff]
        %v365 = vld [vmem:[%s106 + $0x7d8] sm:$0xff]
        %v366 = vld [vmem:[%s106 + $0x7e0] sm:$0xff]
        %v367 = vld [vmem:[%s106 + $0x7e8] sm:$0xff]
        %v368 = vld [vmem:[%s106 + $0x7f0] sm:$0xff]
        %v369 = vld [vmem:[%s106 + $0x7f8] sm:$0xff]
        %v370 = vld [vmem:[#allocation2] sm:$0x1]
        %v371 = vmul.f32 %v114, %v114
        %v372 = vmul.f32 %v115, %v115
        %v373 = vmul.f32 %v116, %v116
        %v374 = vmul.f32 %v117, %v117
        %v375 = vmul.f32 %v118, %v118
        %v376 = vmul.f32 %v119, %v119
        %v377 = vmul.f32 %v120, %v120
        %v378 = vmul.f32 %v121, %v121
        %v379 = vmul.f32 %v122, %v122
        %v380 = vmul.f32 %v123, %v123
        %v381 = vmul.f32 %v124, %v124
        %v382 = vmul.f32 %v125, %v125
        %v383 = vmul.f32 %v126, %v126
        %v384 = vmul.f32 %v127, %v127
        %v385 = vmul.f32 %v128, %v128
        %v386 = vmul.f32 %v129, %v129
        %v387 = vmul.f32 %v130, %v130
        %v388 = vmul.f32 %v131, %v131
        %v389 = vmul.f32 %v132, %v132
        %v390 = vmul.f32 %v133, %v133
        %v391 = vmul.f32 %v134, %v134
        %v392 = vmul.f32 %v135, %v135
        %v393 = vmul.f32 %v136, %v136
        %v394 = vmul.f32 %v137, %v137
        %v395 = vmul.f32 %v138, %v138
        %v396 = vmul.f32 %v139, %v139
        %v397 = vmul.f32 %v140, %v140
        %v398 = vmul.f32 %v141, %v141
        %v399 = vmul.f32 %v142, %v142
        %v400 = vmul.f32 %v143, %v143
        %v401 = vmul.f32 %v144, %v144
        %v402 = vmul.f32 %v145, %v145
        %v403 = vmul.f32 %v146, %v146
        %v404 = vmul.f32 %v147, %v147
        %v405 = vmul.f32 %v148, %v148
        %v406 = vmul.f32 %v149, %v149
        %v407 = vmul.f32 %v150, %v150
        %v408 = vmul.f32 %v151, %v151
        %v409 = vmul.f32 %v152, %v152
        %v410 = vmul.f32 %v153, %v153
        %v411 = vmul.f32 %v154, %v154
        %v412 = vmul.f32 %v155, %v155
        %v413 = vmul.f32 %v156, %v156
        %v414 = vmul.f32 %v157, %v157
        %v415 = vmul.f32 %v158, %v158
        %v416 = vmul.f32 %v159, %v159
        %v417 = vmul.f32 %v160, %v160
        %v418 = vmul.f32 %v161, %v161
        %v419 = vmul.f32 %v162, %v162
        %v420 = vmul.f32 %v163, %v163
        %v421 = vmul.f32 %v164, %v164
        %v422 = vmul.f32 %v165, %v165
        %v423 = vmul.f32 %v166, %v166
        %v424 = vmul.f32 %v167, %v167
        %v425 = vmul.f32 %v168, %v168
        %v426 = vmul.f32 %v169, %v169
        %v427 = vmul.f32 %v170, %v170
        %v428 = vmul.f32 %v171, %v171
        %v429 = vmul.f32 %v172, %v172
        %v430 = vmul.f32 %v173, %v173
        %v431 = vmul.f32 %v174, %v174
        %v432 = vmul.f32 %v175, %v175
        %v433 = vmul.f32 %v176, %v176
        %v434 = vmul.f32 %v177, %v177
        %v435 = vmul.f32 %v178, %v178
        %v436 = vmul.f32 %v179, %v179
        %v437 = vmul.f32 %v180, %v180
        %v438 = vmul.f32 %v181, %v181
        %v439 = vmul.f32 %v182, %v182
        %v440 = vmul.f32 %v183, %v183
        %v441 = vmul.f32 %v184, %v184
        %v442 = vmul.f32 %v185, %v185
        %v443 = vmul.f32 %v186, %v186
        %v444 = vmul.f32 %v187, %v187
        %v445 = vmul.f32 %v188, %v188
        %v446 = vmul.f32 %v189, %v189
        %v447 = vmul.f32 %v190, %v190
        %v448 = vmul.f32 %v191, %v191
        %v449 = vmul.f32 %v192, %v192
        %v450 = vmul.f32 %v193, %v193
        %v451 = vmul.f32 %v194, %v194
        %v452 = vmul.f32 %v195, %v195
        %v453 = vmul.f32 %v196, %v196
        %v454 = vmul.f32 %v197, %v197
        %v455 = vmul.f32 %v198, %v198
        %v456 = vmul.f32 %v199, %v199
        %v457 = vmul.f32 %v200, %v200
        %v458 = vmul.f32 %v201, %v201
        %v459 = vmul.f32 %v202, %v202
        %v460 = vmul.f32 %v203, %v203
        %v461 = vmul.f32 %v204, %v204
        %v462 = vmul.f32 %v205, %v205
        %v463 = vmul.f32 %v206, %v206
        %v464 = vmul.f32 %v207, %v207
        %v465 = vmul.f32 %v208, %v208
        %v466 = vmul.f32 %v209, %v209
        %v467 = vmul.f32 %v210, %v210
        %v468 = vmul.f32 %v211, %v211
        %v469 = vmul.f32 %v212, %v212
        %v470 = vmul.f32 %v213, %v213
        %v471 = vmul.f32 %v214, %v214
        %v472 = vmul.f32 %v215, %v215
        %v473 = vmul.f32 %v216, %v216
        %v474 = vmul.f32 %v217, %v217
        %v475 = vmul.f32 %v218, %v218
        %v476 = vmul.f32 %v219, %v219
        %v477 = vmul.f32 %v220, %v220
        %v478 = vmul.f32 %v221, %v221
        %v479 = vmul.f32 %v222, %v222
        %v480 = vmul.f32 %v223, %v223
        %v481 = vmul.f32 %v224, %v224
        %v482 = vmul.f32 %v225, %v225
        %v483 = vmul.f32 %v226, %v226
        %v484 = vmul.f32 %v227, %v227
        %v485 = vmul.f32 %v228, %v228
        %v486 = vmul.f32 %v229, %v229
        %v487 = vmul.f32 %v230, %v230
        %v488 = vmul.f32 %v231, %v231
        %v489 = vmul.f32 %v232, %v232
        %v490 = vmul.f32 %v233, %v233
        %v491 = vmul.f32 %v234, %v234
        %v492 = vmul.f32 %v235, %v235
        %v493 = vmul.f32 %v236, %v236
        %v494 = vmul.f32 %v237, %v237
        %v495 = vmul.f32 %v238, %v238
        %v496 = vmul.f32 %v239, %v239
        %v497 = vmul.f32 %v240, %v240
        %v498 = vmul.f32 %v241, %v241
        %v499 = vmul.f32 %v242, %v242
        %v500 = vmul.f32 %v243, %v243
        %v501 = vmul.f32 %v244, %v244
        %v502 = vmul.f32 %v245, %v245
        %v503 = vmul.f32 %v246, %v246
        %v504 = vmul.f32 %v247, %v247
        %v505 = vmul.f32 %v248, %v248
        %v506 = vmul.f32 %v249, %v249
        %v507 = vmul.f32 %v250, %v250
        %v508 = vmul.f32 %v251, %v251
        %v509 = vmul.f32 %v252, %v252
        %v510 = vmul.f32 %v253, %v253
        %v511 = vmul.f32 %v254, %v254
        %v512 = vmul.f32 %v255, %v255
        %v513 = vmul.f32 %v256, %v256
        %v514 = vmul.f32 %v257, %v257
        %v515 = vmul.f32 %v258, %v258
        %v516 = vmul.f32 %v259, %v259
        %v517 = vmul.f32 %v260, %v260
        %v518 = vmul.f32 %v261, %v261
        %v519 = vmul.f32 %v262, %v262
        %v520 = vmul.f32 %v263, %v263
        %v521 = vmul.f32 %v264, %v264
        %v522 = vmul.f32 %v265, %v265
        %v523 = vmul.f32 %v266, %v266
        %v524 = vmul.f32 %v267, %v267
        %v525 = vmul.f32 %v268, %v268
        %v526 = vmul.f32 %v269, %v269
        %v527 = vmul.f32 %v270, %v270
        %v528 = vmul.f32 %v271, %v271
        %v529 = vmul.f32 %v272, %v272
        %v530 = vmul.f32 %v273, %v273
        %v531 = vmul.f32 %v274, %v274
        %v532 = vmul.f32 %v275, %v275
        %v533 = vmul.f32 %v276, %v276
        %v534 = vmul.f32 %v277, %v277
        %v535 = vmul.f32 %v278, %v278
        %v536 = vmul.f32 %v279, %v279
        %v537 = vmul.f32 %v280, %v280
        %v538 = vmul.f32 %v281, %v281
        %v539 = vmul.f32 %v282, %v282
        %v540 = vmul.f32 %v283, %v283
        %v541 = vmul.f32 %v284, %v284
        %v542 = vmul.f32 %v285, %v285
        %v543 = vmul.f32 %v286, %v286
        %v544 = vmul.f32 %v287, %v287
        %v545 = vmul.f32 %v288, %v288
        %v546 = vmul.f32 %v289, %v289
        %v547 = vmul.f32 %v290, %v290
        %v548 = vmul.f32 %v291, %v291
        %v549 = vmul.f32 %v292, %v292
        %v550 = vmul.f32 %v293, %v293
        %v551 = vmul.f32 %v294, %v294
        %v552 = vmul.f32 %v295, %v295
        %v553 = vmul.f32 %v296, %v296
        %v554 = vmul.f32 %v297, %v297
        %v555 = vmul.f32 %v298, %v298
        %v556 = vmul.f32 %v299, %v299
        %v557 = vmul.f32 %v300, %v300
        %v558 = vmul.f32 %v301, %v301
        %v559 = vmul.f32 %v302, %v302
        %v560 = vmul.f32 %v303, %v303
        %v561 = vmul.f32 %v304, %v304
        %v562 = vmul.f32 %v305, %v305
        %v563 = vmul.f32 %v306, %v306
        %v564 = vmul.f32 %v307, %v307
        %v565 = vmul.f32 %v308, %v308
        %v566 = vmul.f32 %v309, %v309
        %v567 = vmul.f32 %v310, %v310
        %v568 = vmul.f32 %v311, %v311
        %v569 = vmul.f32 %v312, %v312
        %v570 = vmul.f32 %v313, %v313
        %v571 = vmul.f32 %v314, %v314
        %v572 = vmul.f32 %v315, %v315
        %v573 = vmul.f32 %v316, %v316
        %v574 = vmul.f32 %v317, %v317
        %v575 = vmul.f32 %v318, %v318
        %v576 = vmul.f32 %v319, %v319
        %v577 = vmul.f32 %v320, %v320
        %v578 = vmul.f32 %v321, %v321
        %v579 = vmul.f32 %v322, %v322
        %v580 = vmul.f32 %v323, %v323
        %v581 = vmul.f32 %v324, %v324
        %v582 = vmul.f32 %v325, %v325
        %v583 = vmul.f32 %v326, %v326
        %v584 = vmul.f32 %v327, %v327
        %v585 = vmul.f32 %v328, %v328
        %v586 = vmul.f32 %v329, %v329
        %v587 = vmul.f32 %v330, %v330
        %v588 = vmul.f32 %v331, %v331
        %v589 = vmul.f32 %v332, %v332
        %v590 = vmul.f32 %v333, %v333
        %v591 = vmul.f32 %v334, %v334
        %v592 = vmul.f32 %v335, %v335
        %v593 = vmul.f32 %v336, %v336
        %v594 = vmul.f32 %v337, %v337
        %v595 = vmul.f32 %v338, %v338
        %v596 = vmul.f32 %v339, %v339
        %v597 = vmul.f32 %v340, %v340
        %v598 = vmul.f32 %v341, %v341
        %v599 = vmul.f32 %v342, %v342
        %v600 = vmul.f32 %v343, %v343
        %v601 = vmul.f32 %v344, %v344
        %v602 = vmul.f32 %v345, %v345
        %v603 = vmul.f32 %v346, %v346
        %v604 = vmul.f32 %v347, %v347
        %v605 = vmul.f32 %v348, %v348
        %v606 = vmul.f32 %v349, %v349
        %v607 = vmul.f32 %v350, %v350
        %v608 = vmul.f32 %v351, %v351
        %v609 = vmul.f32 %v352, %v352
        %v610 = vmul.f32 %v353, %v353
        %v611 = vmul.f32 %v354, %v354
        %v612 = vmul.f32 %v355, %v355
        %v613 = vmul.f32 %v356, %v356
        %v614 = vmul.f32 %v357, %v357
        %v615 = vmul.f32 %v358, %v358
        %v616 = vmul.f32 %v359, %v359
        %v617 = vmul.f32 %v360, %v360
        %v618 = vmul.f32 %v361, %v361
        %v619 = vmul.f32 %v362, %v362
        %v620 = vmul.f32 %v363, %v363
        %v621 = vmul.f32 %v364, %v364
        %v622 = vmul.f32 %v365, %v365
        %v623 = vmul.f32 %v366, %v366
        %v624 = vmul.f32 %v367, %v367
        %v625 = vmul.f32 %v368, %v368
        %v626 = vmul.f32 %v369, %v369
        %v627 = vadd.f32 %v371, %v372
        %v628 = vadd.f32 %v627, %v373
        %v629 = vadd.f32 %v628, %v374
        %v630 = vadd.f32 %v629, %v375
        %v631 = vadd.f32 %v630, %v376
        %v632 = vadd.f32 %v631, %v377
        %v633 = vadd.f32 %v632, %v378
        %v634 = vadd.f32 %v633, %v379
        %v635 = vadd.f32 %v634, %v380
        %v636 = vadd.f32 %v635, %v381
        %v637 = vadd.f32 %v636, %v382
        %v638 = vadd.f32 %v637, %v383
        %v639 = vadd.f32 %v638, %v384
        %v640 = vadd.f32 %v639, %v385
        %v641 = vadd.f32 %v640, %v386
        %v642 = vadd.f32 %v641, %v387
        %v643 = vadd.f32 %v642, %v388
        %v644 = vadd.f32 %v643, %v389
        %v645 = vadd.f32 %v644, %v390
        %v646 = vadd.f32 %v645, %v391
        %v647 = vadd.f32 %v646, %v392
        %v648 = vadd.f32 %v647, %v393
        %v649 = vadd.f32 %v648, %v394
        %v650 = vadd.f32 %v649, %v395
        %v651 = vadd.f32 %v650, %v396
        %v652 = vadd.f32 %v651, %v397
        %v653 = vadd.f32 %v652, %v398
        %v654 = vadd.f32 %v653, %v399
        %v655 = vadd.f32 %v654, %v400
        %v656 = vadd.f32 %v655, %v401
        %v657 = vadd.f32 %v656, %v402
        %v658 = vadd.f32 %v657, %v403
        %v659 = vadd.f32 %v658, %v404
        %v660 = vadd.f32 %v659, %v405
        %v661 = vadd.f32 %v660, %v406
        %v662 = vadd.f32 %v661, %v407
        %v663 = vadd.f32 %v662, %v408
        %v664 = vadd.f32 %v663, %v409
        %v665 = vadd.f32 %v664, %v410
        %v666 = vadd.f32 %v665, %v411
        %v667 = vadd.f32 %v666, %v412
        %v668 = vadd.f32 %v667, %v413
        %v669 = vadd.f32 %v668, %v414
        %v670 = vadd.f32 %v669, %v415
        %v671 = vadd.f32 %v670, %v416
        %v672 = vadd.f32 %v671, %v417
        %v673 = vadd.f32 %v672, %v418
        %v674 = vadd.f32 %v673, %v419
        %v675 = vadd.f32 %v674, %v420
        %v676 = vadd.f32 %v675, %v421
        %v677 = vadd.f32 %v676, %v422
        %v678 = vadd.f32 %v677, %v423
        %v679 = vadd.f32 %v678, %v424
        %v680 = vadd.f32 %v679, %v425
        %v681 = vadd.f32 %v680, %v426
        %v682 = vadd.f32 %v681, %v427
        %v683 = vadd.f32 %v682, %v428
        %v684 = vadd.f32 %v683, %v429
        %v685 = vadd.f32 %v684, %v430
        %v686 = vadd.f32 %v685, %v431
        %v687 = vadd.f32 %v686, %v432
        %v688 = vadd.f32 %v687, %v433
        %v689 = vadd.f32 %v688, %v434
        %v690 = vadd.f32 %v689, %v435
        %v691 = vadd.f32 %v690, %v436
        %v692 = vadd.f32 %v691, %v437
        %v693 = vadd.f32 %v692, %v438
        %v694 = vadd.f32 %v693, %v439
        %v695 = vadd.f32 %v694, %v440
        %v696 = vadd.f32 %v695, %v441
        %v697 = vadd.f32 %v696, %v442
        %v698 = vadd.f32 %v697, %v443
        %v699 = vadd.f32 %v698, %v444
        %v700 = vadd.f32 %v699, %v445
        %v701 = vadd.f32 %v700, %v446
        %v702 = vadd.f32 %v701, %v447
        %v703 = vadd.f32 %v702, %v448
        %v704 = vadd.f32 %v703, %v449
        %v705 = vadd.f32 %v704, %v450
        %v706 = vadd.f32 %v705, %v451
        %v707 = vadd.f32 %v706, %v452
        %v708 = vadd.f32 %v707, %v453
        %v709 = vadd.f32 %v708, %v454
        %v710 = vadd.f32 %v709, %v455
        %v711 = vadd.f32 %v710, %v456
        %v712 = vadd.f32 %v711, %v457
        %v713 = vadd.f32 %v712, %v458
        %v714 = vadd.f32 %v713, %v459
        %v715 = vadd.f32 %v714, %v460
        %v716 = vadd.f32 %v715, %v461
        %v717 = vadd.f32 %v716, %v462
        %v718 = vadd.f32 %v717, %v463
        %v719 = vadd.f32 %v718, %v464
        %v720 = vadd.f32 %v719, %v465
        %v721 = vadd.f32 %v720, %v466
        %v722 = vadd.f32 %v721, %v467
        %v723 = vadd.f32 %v722, %v468
        %v724 = vadd.f32 %v723, %v469
        %v725 = vadd.f32 %v724, %v470
        %v726 = vadd.f32 %v725, %v471
        %v727 = vadd.f32 %v726, %v472
        %v728 = vadd.f32 %v727, %v473
        %v729 = vadd.f32 %v728, %v474
        %v730 = vadd.f32 %v729, %v475
        %v731 = vadd.f32 %v730, %v476
        %v732 = vadd.f32 %v731, %v477
        %v733 = vadd.f32 %v732, %v478
        %v734 = vadd.f32 %v733, %v479
        %v735 = vadd.f32 %v734, %v480
        %v736 = vadd.f32 %v735, %v481
        %v737 = vadd.f32 %v736, %v482
        %v738 = vadd.f32 %v737, %v483
        %v739 = vadd.f32 %v738, %v484
        %v740 = vadd.f32 %v739, %v485
        %v741 = vadd.f32 %v740, %v486
        %v742 = vadd.f32 %v741, %v487
        %v743 = vadd.f32 %v742, %v488
        %v744 = vadd.f32 %v743, %v489
        %v745 = vadd.f32 %v744, %v490
        %v746 = vadd.f32 %v745, %v491
        %v747 = vadd.f32 %v746, %v492
        %v748 = vadd.f32 %v747, %v493
        %v749 = vadd.f32 %v748, %v494
        %v750 = vadd.f32 %v749, %v495
        %v751 = vadd.f32 %v750, %v496
        %v752 = vadd.f32 %v751, %v497
        %v753 = vadd.f32 %v752, %v498
        %v754 = vadd.f32 %v753, %v499
        %v755 = vadd.f32 %v754, %v500
        %v756 = vadd.f32 %v755, %v501
        %v757 = vadd.f32 %v756, %v502
        %v758 = vadd.f32 %v757, %v503
        %v759 = vadd.f32 %v758, %v504
        %v760 = vadd.f32 %v759, %v505
        %v761 = vadd.f32 %v760, %v506
        %v762 = vadd.f32 %v761, %v507
        %v763 = vadd.f32 %v762, %v508
        %v764 = vadd.f32 %v763, %v509
        %v765 = vadd.f32 %v764, %v510
        %v766 = vadd.f32 %v765, %v511
        %v767 = vadd.f32 %v766, %v512
        %v768 = vadd.f32 %v767, %v513
        %v769 = vadd.f32 %v768, %v514
        %v770 = vadd.f32 %v769, %v515
        %v771 = vadd.f32 %v770, %v516
        %v772 = vadd.f32 %v771, %v517
        %v773 = vadd.f32 %v772, %v518
        %v774 = vadd.f32 %v773, %v519
        %v775 = vadd.f32 %v774, %v520
        %v776 = vadd.f32 %v775, %v521
        %v777 = vadd.f32 %v776, %v522
        %v778 = vadd.f32 %v777, %v523
        %v779 = vadd.f32 %v778, %v524
        %v780 = vadd.f32 %v779, %v525
        %v781 = vadd.f32 %v780, %v526
        %v782 = vadd.f32 %v781, %v527
        %v783 = vadd.f32 %v782, %v528
        %v784 = vadd.f32 %v783, %v529
        %v785 = vadd.f32 %v784, %v530
        %v786 = vadd.f32 %v785, %v531
        %v787 = vadd.f32 %v786, %v532
        %v788 = vadd.f32 %v787, %v533
        %v789 = vadd.f32 %v788, %v534
        %v790 = vadd.f32 %v789, %v535
        %v791 = vadd.f32 %v790, %v536
        %v792 = vadd.f32 %v791, %v537
        %v793 = vadd.f32 %v792, %v538
        %v794 = vadd.f32 %v793, %v539
        %v795 = vadd.f32 %v794, %v540
        %v796 = vadd.f32 %v795, %v541
        %v797 = vadd.f32 %v796, %v542
        %v798 = vadd.f32 %v797, %v543
        %v799 = vadd.f32 %v798, %v544
        %v800 = vadd.f32 %v799, %v545
        %v801 = vadd.f32 %v800, %v546
        %v802 = vadd.f32 %v801, %v547
        %v803 = vadd.f32 %v802, %v548
        %v804 = vadd.f32 %v803, %v549
        %v805 = vadd.f32 %v804, %v550
        %v806 = vadd.f32 %v805, %v551
        %v807 = vadd.f32 %v806, %v552
        %v808 = vadd.f32 %v807, %v553
        %v809 = vadd.f32 %v808, %v554
        %v810 = vadd.f32 %v809, %v555
        %v811 = vadd.f32 %v810, %v556
        %v812 = vadd.f32 %v811, %v557
        %v813 = vadd.f32 %v812, %v558
        %v814 = vadd.f32 %v813, %v559
        %v815 = vadd.f32 %v814, %v560
        %v816 = vadd.f32 %v815, %v561
        %v817 = vadd.f32 %v816, %v562
        %v818 = vadd.f32 %v817, %v563
        %v819 = vadd.f32 %v818, %v564
        %v820 = vadd.f32 %v819, %v565
        %v821 = vadd.f32 %v820, %v566
        %v822 = vadd.f32 %v821, %v567
        %v823 = vadd.f32 %v822, %v568
        %v824 = vadd.f32 %v823, %v569
        %v825 = vadd.f32 %v824, %v570
        %v826 = vadd.f32 %v825, %v571
        %v827 = vadd.f32 %v826, %v572
        %v828 = vadd.f32 %v827, %v573
        %v829 = vadd.f32 %v828, %v574
        %v830 = vadd.f32 %v829, %v575
        %v831 = vadd.f32 %v830, %v576
        %v832 = vadd.f32 %v831, %v577
        %v833 = vadd.f32 %v832, %v578
        %v834 = vadd.f32 %v833, %v579
        %v835 = vadd.f32 %v834, %v580
        %v836 = vadd.f32 %v835, %v581
        %v837 = vadd.f32 %v836, %v582
        %v838 = vadd.f32 %v837, %v583
        %v839 = vadd.f32 %v838, %v584
        %v840 = vadd.f32 %v839, %v585
        %v841 = vadd.f32 %v840, %v586
        %v842 = vadd.f32 %v841, %v587
        %v843 = vadd.f32 %v842, %v588
        %v844 = vadd.f32 %v843, %v589
        %v845 = vadd.f32 %v844, %v590
        %v846 = vadd.f32 %v845, %v591
        %v847 = vadd.f32 %v846, %v592
        %v848 = vadd.f32 %v847, %v593
        %v849 = vadd.f32 %v848, %v594
        %v850 = vadd.f32 %v849, %v595
        %v851 = vadd.f32 %v850, %v596
        %v852 = vadd.f32 %v851, %v597
        %v853 = vadd.f32 %v852, %v598
        %v854 = vadd.f32 %v853, %v599
        %v855 = vadd.f32 %v854, %v600
        %v856 = vadd.f32 %v855, %v601
        %v857 = vadd.f32 %v856, %v602
        %v858 = vadd.f32 %v857, %v603
        %v859 = vadd.f32 %v858, %v604
        %v860 = vadd.f32 %v859, %v605
        %v861 = vadd.f32 %v860, %v606
        %v862 = vadd.f32 %v861, %v607
        %v863 = vadd.f32 %v862, %v608
        %v864 = vadd.f32 %v863, %v609
        %v865 = vadd.f32 %v864, %v610
        %v866 = vadd.f32 %v865, %v611
        %v867 = vadd.f32 %v866, %v612
        %v868 = vadd.f32 %v867, %v613
        %v869 = vadd.f32 %v868, %v614
        %v870 = vadd.f32 %v869, %v615
        %v871 = vadd.f32 %v870, %v616
        %v872 = vadd.f32 %v871, %v617
        %v873 = vadd.f32 %v872, %v618
        %v874 = vadd.f32 %v873, %v619
        %v875 = vadd.f32 %v874, %v620
        %v876 = vadd.f32 %v875, %v621
        %v877 = vadd.f32 %v876, %v622
        %v878 = vadd.f32 %v877, %v623
        %v879 = vadd.f32 %v878, %v624
        %v880 = vadd.f32 %v879, %v625
        %v881 = vadd.f32 %v880, %v626
        %882 = vadd.xlane.f32.xlu0 %v881
        %v883 = vpop.xlane.xlu0 %882
        %v884 = vrot.slane %v883, 4
        %v885 = vadd.f32 %v883, %v884
        %v886 = vrot.slane %v885, 2
        %v887 = vadd.f32 %v885, %v886
        %v888 = vrot.slane %v887, 1
        %v889 = vadd.f32 %v887, %v888
        %s890 = vtos %v889
        %v891 = vstv %s890
        %v892 = vadd.f32 %v370, %v891
        %vm893 = vcmask 0
        %894 = vst.msk [vmem:[#allocation2] sm:$0x1] %vm893, %v892
        // Predicated region
        $region29: #{background_noise.4} parent=23 // pred_check
          %p895 = pneg %p52
        $region30: #{background_noise.4} parent=23 // pred_check_branch
          %897 = sbr.rel (%p895) target = $region32
        $region31: #{background_noise.4} parent=23 // pred_region
          %s899 = ssub.s32 16, 16
          %900 = vsyncadd [#allocation3], %s899
          %s902 = sshll.u32 [#allocation2], 4
          %s903 = int_to_ptr.vmem [resolvable:$true] %s902
          %905 = dma.vmem_to_hbm [thread:$0]  %s903, 16, %s1, [#allocation3]
        $region32: #{background_noise.4} parent=23 // pred_fallthru
          _
        // Predicated region
        $region33: #{background_noise.4} parent=23 // pred_check
          %p906 = pneg %p52
        $region34: #{background_noise.4} parent=23 // pred_check_branch
          %908 = sbr.rel (%p906) target = $region36
        $region35: #{background_noise.4} parent=23 // pred_region
          %909 = dma.done [#allocation3], 16
        $region36: #{background_noise.4} parent=23 // pred_fallthru
          _
      $region24: #{background_noise.4} parent=5 // pred_fallthru
        _
      %p910 = scmp.le.s32.totalorder 2, %s8
      // Predicated region
      $region37: #{background_noise.4} parent=5 // pred_check
        %p911 = pneg %p910
      $region38: #{background_noise.4} parent=5 // pred_check_branch
        %913 = sbr.rel (%p911) target = $region40
      $region39: #{background_noise.4} parent=5 // pred_region
        %s914 = ssub.s32 %s8, 2
      $region40: #{background_noise.4} parent=5 // pred_fallthru
        _
    $region6: #{background_noise.4} parent=1 // loop_footer
      %s12 = sadd.s32 1, %s8
    $region7: #{background_noise.4} parent=1 // loop_footer_branch
      %7 = sbr.rel target = $region3
    $region8: #{background_noise.4} parent=1 // loop_exit
      _
    %915 = vsyncpa [#allocation3], 1
    %s916 = scalar_lea.sflag [#allocation3], 1
    %917 = vsyncpa %s916, 1

// kernel: background_noise.5
$region0: #{background_noise.5}
  #allocation0 [shape = 'u32[]', space=smem, size = 0x4, offset = 0x4, fixed_abs, tag = 'smem constant byte address 0x4 - core index']
  #allocation1 [shape = 'u32[144,128]{1,0:T(1,128)}', space=vmem, size = 0x12000, scoped, tag = 'internal scratch']
  #allocation2 [shape = 'f32[1]{0:T(128)S(6)}', space=smem, size = 0x200, scoped, tag = 'scoped memory for background_noise.5']
  %s0 = inlined_call_operand.<no memory space> [shape: f32[1], index: 0, kind: input, shape index: {}]
  %s1 = inlined_call_operand.vmem [shape: f32[512,1024], index: 1, kind: input, shape index: {}]
  %s2 = inlined_call_operand.vmem [shape: f32[512,1024], index: 2, kind: input, shape index: {}]
  %s3 = inlined_call_operand.vmem [shape: f32[512,1024], index: 3, kind: output, shape index: {}]
  %s4 = sld [smem:[#allocation0]]
  $region45: #{background_noise.5} parent=0
    _
  %s6 = ssub.s32 1, %s4
  %s7 = scalar_select 0, %s6, %s4
  %8 = sst [smem:[#allocation2]] %s0
  loop: start=0, step=1, limit=4
  $region2: #{background_noise.5} parent=0 // loop_pre_header
    _
  $region3: #{background_noise.5} parent=0 // loop_header
    %s10 = sphi 0, %s14
    %p11 = scmp.ge.s32.totalorder %s10, 4
    %s18 = sphi 0, %s18
    %s20 = sphi 0, %s18
    %s21 = sphi 0, %s20
    %s35 = sphi 0, %s21
    %s41 = sphi 0, %s43
    %s44 = sphi 0, %s41
    %s45 = sphi 0, %s44
    %s61 = sphi 0, %s45
    %s67 = sphi 0, %s69
    %s70 = sphi 0, %s67
    %s71 = sphi 0, %s70
    %s87 = sphi 0, %s71
    %s93 = sphi 0, %s95
    %s96 = sphi 0, %s93
    %s97 = sphi 0, %s96
    %s113 = sphi 0, %s97
  $region4: #{background_noise.5} parent=0 // loop_header_branch
    %13 = sbr.rel (%p11) target = $region8
  $region5: #{background_noise.5} parent=0 // loop_body
    %s15 = ssub.s32 %s10, 1
    %s16 = ssub.s32 %s10, 2
    %s17 = sadd.s32 %s10, 1
    %s19 = sadd.s32 %s18, 1
    %p22 = scmp.eq.s32.totalorder %s10, 1
    %p23 = scmp.ne.s32.totalorder %s18, %s20
    %p24 = scmp.eq.s32.totalorder %s10, 0
    %p25 = por %p23, %p24
    %p26 = scmp.ne.s32.totalorder %s18, %s20
    %p27 = scmp.eq.s32.totalorder %s15, 1
    %p28 = por %p26, %p27
    %p29 = scmp.ne.s32.totalorder %s20, %s21
    %p30 = scmp.eq.s32.totalorder %s15, 0
    %p31 = por %p29, %p30
    %p32 = scmp.ne.s32.totalorder %s20, %s21
    %p33 = scmp.eq.s32.totalorder %s16, 1
    %p34 = por %p32, %p33
    %p36 = scmp.ne.s32.totalorder %s21, %s35
    %p37 = scmp.eq.s32.totalorder %s16, 0
    %p38 = por %p36, %p37
    %s39 = ssub.s32 %s10, %s17
    %p40 = scmp.eq.s32.totalorder %s39, 0
    %s42 = sadd.s32 %s41, 1
    %s43 = scalar_select %p40, %s41, %s42
    %p46 = pneg %p40
    %p47 = scmp.eq.s32.totalorder %s10, 1
    %p48 = por %p46, %p47
    %p49 = scmp.ne.s32.totalorder %s41, %s44
    %p50 = scmp.eq.s32.totalorder %s10, 0
    %p51 = por %p49, %p50
    %p52 = scmp.ne.s32.totalorder %s41, %s44
    %p53 = scmp.eq.s32.totalorder %s15, 1
    %p54 = por %p52, %p53
    %p55 = scmp.ne.s32.totalorder %s44, %s45
    %p56 = scmp.eq.s32.totalorder %s15, 0
    %p57 = por %p55, %p56
    %p58 = scmp.ne.s32.totalorder %s44, %s45
    %p59 = scmp.eq.s32.totalorder %s16, 1
    %p60 = por %p58, %p59
    %p62 = scmp.ne.s32.totalorder %s45, %s61
    %p63 = scmp.eq.s32.totalorder %s16, 0
    %p64 = por %p62, %p63
    %s65 = ssub.s32 %s10, %s17
    %p66 = scmp.eq.s32.totalorder %s65, 0
    %s68 = sadd.s32 %s67, 1
    %s69 = scalar_select %p66, %s67, %s68
    %p72 = pneg %p66
    %p73 = scmp.eq.s32.totalorder %s10, 1
    %p74 = por %p72, %p73
    %p75 = scmp.ne.s32.totalorder %s67, %s70
    %p76 = scmp.eq.s32.totalorder %s10, 0
    %p77 = por %p75, %p76
    %p78 = scmp.ne.s32.totalorder %s67, %s70
    %p79 = scmp.eq.s32.totalorder %s15, 1
    %p80 = por %p78, %p79
    %p81 = scmp.ne.s32.totalorder %s70, %s71
    %p82 = scmp.eq.s32.totalorder %s15, 0
    %p83 = por %p81, %p82
    %p84 = scmp.ne.s32.totalorder %s70, %s71
    %p85 = scmp.eq.s32.totalorder %s16, 1
    %p86 = por %p84, %p85
    %p88 = scmp.ne.s32.totalorder %s71, %s87
    %p89 = scmp.eq.s32.totalorder %s16, 0
    %p90 = por %p88, %p89
    %s91 = ssub.s32 %s10, %s17
    %p92 = scmp.eq.s32.totalorder %s91, 0
    %s94 = sadd.s32 %s93, 1
    %s95 = scalar_select %p92, %s93, %s94
    %p98 = pneg %p92
    %p99 = scmp.eq.s32.totalorder %s10, 1
    %p100 = por %p98, %p99
    %p101 = scmp.ne.s32.totalorder %s93, %s96
    %p102 = scmp.eq.s32.totalorder %s10, 0
    %p103 = por %p101, %p102
    %p104 = scmp.ne.s32.totalorder %s93, %s96
    %p105 = scmp.eq.s32.totalorder %s15, 1
    %p106 = por %p104, %p105
    %p107 = scmp.ne.s32.totalorder %s96, %s97
    %p108 = scmp.eq.s32.totalorder %s15, 0
    %p109 = por %p107, %p108
    %p110 = scmp.ne.s32.totalorder %s96, %s97
    %p111 = scmp.eq.s32.totalorder %s16, 1
    %p112 = por %p110, %p111
    %p114 = scmp.ne.s32.totalorder %s97, %s113
    %p115 = scmp.eq.s32.totalorder %s16, 0
    %p116 = por %p114, %p115
    %p117 = scmp.le.s32.totalorder 1, %s10
    %p118 = scmp.lt.s32.totalorder %s10, 3
    %p119 = pnand %p117, %p118
    %p120 = pneg %p119
    // Predicated region
    $region9: #{background_noise.5} parent=5 // pred_check
      _
    $region10: #{background_noise.5} parent=5 // pred_check_branch
      %122 = sbr.rel (%p119) target = $region12
    $region11: #{background_noise.5} parent=5 // pred_region
      %s123 = ssub.s32 %s10, 1
      // Predicated region
      $region13: #{background_noise.5} parent=11 // pred_check
        %p124 = pneg %p31
      $region14: #{background_noise.5} parent=11 // pred_check_branch
        %126 = sbr.rel (%p124) target = $region16
      $region15: #{background_noise.5} parent=11 // pred_region
        _
      $region16: #{background_noise.5} parent=11 // pred_fallthru
        _
    $region12: #{background_noise.5} parent=5 // pred_fallthru
      _
    %p127 = scmp.lt.s32.totalorder %s10, 2
    // Predicated region
    $region17: #{background_noise.5} parent=5 // pred_check
      %p128 = pneg %p127
    $region18: #{background_noise.5} parent=5 // pred_check_branch
      %130 = sbr.rel (%p128) target = $region20
    $region19: #{background_noise.5} parent=5 // pred_region
      // Predicated region
      $region21: #{background_noise.5} parent=19 // pred_check
        %p131 = pneg %p51
      $region22: #{background_noise.5} parent=19 // pred_check_branch
        %133 = sbr.rel (%p131) target = $region24
      $region23: #{background_noise.5} parent=19 // pred_region
        %s134 = smul.u32 32, %s10
        %p135 = scmp.lt.s32.totalorder %s134, 63
        %s136 = scalar_select %p135, %s134, 63
        %s137 = smul.addr %s136, 8
        %s138 = smul.addr %s137, 8
        %s139 = scalar_lea.vmem %s1, %s138
        %s140 = smul.u32 32, %s10
      $region24: #{background_noise.5} parent=19 // pred_fallthru
        _
      // Predicated region
      $region25: #{background_noise.5} parent=19 // pred_check
        %p141 = pneg %p77
      $region26: #{background_noise.5} parent=19 // pred_check_branch
        %143 = sbr.rel (%p141) target = $region28
      $region27: #{background_noise.5} parent=19 // pred_region
        %s144 = smul.u32 32, %s10
        %p145 = scmp.lt.s32.totalorder %s144, 63
        %s146 = scalar_select %p145, %s144, 63
        %s147 = smul.addr %s146, 8
        %s148 = smul.addr %s147, 8
        %s149 = scalar_lea.vmem %s2, %s148
        %s150 = smul.u32 32, %s10
      $region28: #{background_noise.5} parent=19 // pred_fallthru
        _
    $region20: #{background_noise.5} parent=5 // pred_fallthru
      _
    %p151 = scmp.le.s32.totalorder 1, %s10
    %p152 = scmp.lt.s32.totalorder %s10, 3
    %p153 = pnand %p151, %p152
    %p154 = pneg %p153
    // Predicated region
    $region29: #{background_noise.5} parent=5 // pred_check
      _
    $region30: #{background_noise.5} parent=5 // pred_check_branch
      %156 = sbr.rel (%p153) target = $region32
    $region31: #{background_noise.5} parent=5 // pred_region
      %s157 = ssub.s32 %s10, 1
      %p158 = pneg %p31
      %p159 = pneg %p28
      %s160 = smul.u32 32, %s15
      %p161 = scmp.lt.s32.totalorder %s160, 63
      %s162 = scalar_select %p161, %s160, 63
      %s163 = smul.addr %s162, 8
      %s164 = smul.addr %s163, 8
      %s165 = scalar_lea.vmem %s1, %s164
      %p166 = pneg %p57
      %p167 = pneg %p54
      %s168 = smul.u32 32, %s15
      %p169 = scmp.lt.s32.totalorder %s168, 63
      %s170 = scalar_select %p169, %s168, 63
      %s171 = smul.addr %s170, 8
      %s172 = smul.addr %s171, 8
      %s173 = scalar_lea.vmem %s2, %s172
      %p174 = pneg %p83
      %p175 = pneg %p80
      %p176 = pneg %p109
      %p177 = pneg %p106
      %s178 = smul.u32 32, %s15
      %p179 = scmp.lt.s32.totalorder %s178, 63
      %s180 = scalar_select %p179, %s178, 63
      %s181 = smul.addr %s180, 8
      %s182 = smul.addr %s181, 8
      %s183 = scalar_lea.vmem %s3, %s182
      %s184 = smul.u32 32, %s15
      %p185 = scmp.lt.s32.totalorder %s184, 63
      %s186 = scalar_select %p185, %s184, 63
      %s187 = smul.addr %s186, 8
      %s188 = smul.addr %s187, 8
      %s189 = scalar_lea.vmem %s1, %s188
      %s190 = smul.u32 32, %s15
      %s191 = smul.u32 32, %s15
      %p192 = scmp.lt.s32.totalorder %s191, 63
      %s193 = scalar_select %p192, %s191, 63
      %s194 = smul.addr %s193, 8
      %s195 = smul.addr %s194, 8
      %s196 = scalar_lea.vmem %s2, %s195
      %s197 = smul.u32 32, %s15
      %s198 = smul.u32 32, %s15
      %p199 = scmp.lt.s32.totalorder %s198, 63
      %s200 = scalar_select %p199, %s198, 63
      %s201 = smul.addr %s200, 8
      %s202 = smul.addr %s201, 8
      %s203 = scalar_lea.vmem %s3, %s202
      %s204 = smul.u32 32, %s15
      %s205 = sld [smem:[#allocation2]]
      %v206 = vld [vmem:[%s189] sm:$0xff]
      %v207 = vld [vmem:[%s189 + $0x8] sm:$0xff]
      %v208 = vld [vmem:[%s189 + $0x10] sm:$0xff]
      %v209 = vld [vmem:[%s189 + $0x18] sm:$0xff]
      %v210 = vld [vmem:[%s189 + $0x20] sm:$0xff]
      %v211 = vld [vmem:[%s189 + $0x28] sm:$0xff]
      %v212 = vld [vmem:[%s189 + $0x30] sm:$0xff]
      %v213 = vld [vmem:[%s189 + $0x38] sm:$0xff]
      %v214 = vld [vmem:[%s189 + $0x40] sm:$0xff]
      %v215 = vld [vmem:[%s189 + $0x48] sm:$0xff]
      %v216 = vld [vmem:[%s189 + $0x50] sm:$0xff]
      %v217 = vld [vmem:[%s189 + $0x58] sm:$0xff]
      %v218 = vld [vmem:[%s189 + $0x60] sm:$0xff]
      %v219 = vld [vmem:[%s189 + $0x68] sm:$0xff]
      %v220 = vld [vmem:[%s189 + $0x70] sm:$0xff]
      %v221 = vld [vmem:[%s189 + $0x78] sm:$0xff]
      %v222 = vld [vmem:[%s189 + $0x80] sm:$0xff]
      %v223 = vld [vmem:[%s189 + $0x88] sm:$0xff]
      %v224 = vld [vmem:[%s189 + $0x90] sm:$0xff]
      %v225 = vld [vmem:[%s189 + $0x98] sm:$0xff]
      %v226 = vld [vmem:[%s189 + $0xa0] sm:$0xff]
      %v227 = vld [vmem:[%s189 + $0xa8] sm:$0xff]
      %v228 = vld [vmem:[%s189 + $0xb0] sm:$0xff]
      %v229 = vld [vmem:[%s189 + $0xb8] sm:$0xff]
      %v230 = vld [vmem:[%s189 + $0xc0] sm:$0xff]
      %v231 = vld [vmem:[%s189 + $0xc8] sm:$0xff]
      %v232 = vld [vmem:[%s189 + $0xd0] sm:$0xff]
      %v233 = vld [vmem:[%s189 + $0xd8] sm:$0xff]
      %v234 = vld [vmem:[%s189 + $0xe0] sm:$0xff]
      %v235 = vld [vmem:[%s189 + $0xe8] sm:$0xff]
      %v236 = vld [vmem:[%s189 + $0xf0] sm:$0xff]
      %v237 = vld [vmem:[%s189 + $0xf8] sm:$0xff]
      %v238 = vld [vmem:[%s189 + $0x100] sm:$0xff]
      %v239 = vld [vmem:[%s189 + $0x108] sm:$0xff]
      %v240 = vld [vmem:[%s189 + $0x110] sm:$0xff]
      %v241 = vld [vmem:[%s189 + $0x118] sm:$0xff]
      %v242 = vld [vmem:[%s189 + $0x120] sm:$0xff]
      %v243 = vld [vmem:[%s189 + $0x128] sm:$0xff]
      %v244 = vld [vmem:[%s189 + $0x130] sm:$0xff]
      %v245 = vld [vmem:[%s189 + $0x138] sm:$0xff]
      %v246 = vld [vmem:[%s189 + $0x140] sm:$0xff]
      %v247 = vld [vmem:[%s189 + $0x148] sm:$0xff]
      %v248 = vld [vmem:[%s189 + $0x150] sm:$0xff]
      %v249 = vld [vmem:[%s189 + $0x158] sm:$0xff]
      %v250 = vld [vmem:[%s189 + $0x160] sm:$0xff]
      %v251 = vld [vmem:[%s189 + $0x168] sm:$0xff]
      %v252 = vld [vmem:[%s189 + $0x170] sm:$0xff]
      %v253 = vld [vmem:[%s189 + $0x178] sm:$0xff]
      %v254 = vld [vmem:[%s189 + $0x180] sm:$0xff]
      %v255 = vld [vmem:[%s189 + $0x188] sm:$0xff]
      %v256 = vld [vmem:[%s189 + $0x190] sm:$0xff]
      %v257 = vld [vmem:[%s189 + $0x198] sm:$0xff]
      %v258 = vld [vmem:[%s189 + $0x1a0] sm:$0xff]
      %v259 = vld [vmem:[%s189 + $0x1a8] sm:$0xff]
      %v260 = vld [vmem:[%s189 + $0x1b0] sm:$0xff]
      %v261 = vld [vmem:[%s189 + $0x1b8] sm:$0xff]
      %v262 = vld [vmem:[%s189 + $0x1c0] sm:$0xff]
      %v263 = vld [vmem:[%s189 + $0x1c8] sm:$0xff]
      %v264 = vld [vmem:[%s189 + $0x1d0] sm:$0xff]
      %v265 = vld [vmem:[%s189 + $0x1d8] sm:$0xff]
      %v266 = vld [vmem:[%s189 + $0x1e0] sm:$0xff]
      %v267 = vld [vmem:[%s189 + $0x1e8] sm:$0xff]
      %v268 = vld [vmem:[%s189 + $0x1f0] sm:$0xff]
      %v269 = vld [vmem:[%s189 + $0x1f8] sm:$0xff]
      %v270 = vld [vmem:[%s189 + $0x200] sm:$0xff]
      %v271 = vld [vmem:[%s189 + $0x208] sm:$0xff]
      %v272 = vld [vmem:[%s189 + $0x210] sm:$0xff]
      %v273 = vld [vmem:[%s189 + $0x218] sm:$0xff]
      %v274 = vld [vmem:[%s189 + $0x220] sm:$0xff]
      %v275 = vld [vmem:[%s189 + $0x228] sm:$0xff]
      %v276 = vld [vmem:[%s189 + $0x230] sm:$0xff]
      %v277 = vld [vmem:[%s189 + $0x238] sm:$0xff]
      %v278 = vld [vmem:[%s189 + $0x240] sm:$0xff]
      %v279 = vld [vmem:[%s189 + $0x248] sm:$0xff]
      %v280 = vld [vmem:[%s189 + $0x250] sm:$0xff]
      %v281 = vld [vmem:[%s189 + $0x258] sm:$0xff]
      %v282 = vld [vmem:[%s189 + $0x260] sm:$0xff]
      %v283 = vld [vmem:[%s189 + $0x268] sm:$0xff]
      %v284 = vld [vmem:[%s189 + $0x270] sm:$0xff]
      %v285 = vld [vmem:[%s189 + $0x278] sm:$0xff]
      %v286 = vld [vmem:[%s189 + $0x280] sm:$0xff]
      %v287 = vld [vmem:[%s189 + $0x288] sm:$0xff]
      %v288 = vld [vmem:[%s189 + $0x290] sm:$0xff]
      %v289 = vld [vmem:[%s189 + $0x298] sm:$0xff]
      %v290 = vld [vmem:[%s189 + $0x2a0] sm:$0xff]
      %v291 = vld [vmem:[%s189 + $0x2a8] sm:$0xff]
      %v292 = vld [vmem:[%s189 + $0x2b0] sm:$0xff]
      %v293 = vld [vmem:[%s189 + $0x2b8] sm:$0xff]
      %v294 = vld [vmem:[%s189 + $0x2c0] sm:$0xff]
      %v295 = vld [vmem:[%s189 + $0x2c8] sm:$0xff]
      %v296 = vld [vmem:[%s189 + $0x2d0] sm:$0xff]
      %v297 = vld [vmem:[%s189 + $0x2d8] sm:$0xff]
      %v298 = vld [vmem:[%s189 + $0x2e0] sm:$0xff]
      %v299 = vld [vmem:[%s189 + $0x2e8] sm:$0xff]
      %v300 = vld [vmem:[%s189 + $0x2f0] sm:$0xff]
      %v301 = vld [vmem:[%s189 + $0x2f8] sm:$0xff]
      %v302 = vld [vmem:[%s189 + $0x300] sm:$0xff]
      %v303 = vld [vmem:[%s189 + $0x308] sm:$0xff]
      %v304 = vld [vmem:[%s189 + $0x310] sm:$0xff]
      %v305 = vld [vmem:[%s189 + $0x318] sm:$0xff]
      %v306 = vld [vmem:[%s189 + $0x320] sm:$0xff]
      %v307 = vld [vmem:[%s189 + $0x328] sm:$0xff]
      %v308 = vld [vmem:[%s189 + $0x330] sm:$0xff]
      %v309 = vld [vmem:[%s189 + $0x338] sm:$0xff]
      %v310 = vld [vmem:[%s189 + $0x340] sm:$0xff]
      %v311 = vld [vmem:[%s189 + $0x348] sm:$0xff]
      %v312 = vld [vmem:[%s189 + $0x350] sm:$0xff]
      %v313 = vld [vmem:[%s189 + $0x358] sm:$0xff]
      %v314 = vld [vmem:[%s189 + $0x360] sm:$0xff]
      %v315 = vld [vmem:[%s189 + $0x368] sm:$0xff]
      %v316 = vld [vmem:[%s189 + $0x370] sm:$0xff]
      %v317 = vld [vmem:[%s189 + $0x378] sm:$0xff]
      %v318 = vld [vmem:[%s189 + $0x380] sm:$0xff]
      %v319 = vld [vmem:[%s189 + $0x388] sm:$0xff]
      %v320 = vld [vmem:[%s189 + $0x390] sm:$0xff]
      %v321 = vld [vmem:[%s189 + $0x398] sm:$0xff]
      %v322 = vld [vmem:[%s189 + $0x3a0] sm:$0xff]
      %v323 = vld [vmem:[%s189 + $0x3a8] sm:$0xff]
      %v324 = vld [vmem:[%s189 + $0x3b0] sm:$0xff]
      %v325 = vld [vmem:[%s189 + $0x3b8] sm:$0xff]
      %v326 = vld [vmem:[%s189 + $0x3c0] sm:$0xff]
      %v327 = vld [vmem:[%s189 + $0x3c8] sm:$0xff]
      %v328 = vld [vmem:[%s189 + $0x3d0] sm:$0xff]
      %v329 = vld [vmem:[%s189 + $0x3d8] sm:$0xff]
      %v330 = vld [vmem:[%s189 + $0x3e0] sm:$0xff]
      %v331 = vld [vmem:[%s189 + $0x3e8] sm:$0xff]
      %v332 = vld [vmem:[%s189 + $0x3f0] sm:$0xff]
      %v333 = vld [vmem:[%s189 + $0x3f8] sm:$0xff]
      %v334 = vld [vmem:[%s189 + $0x400] sm:$0xff]
      %v335 = vld [vmem:[%s189 + $0x408] sm:$0xff]
      %v336 = vld [vmem:[%s189 + $0x410] sm:$0xff]
      %v337 = vld [vmem:[%s189 + $0x418] sm:$0xff]
      %v338 = vld [vmem:[%s189 + $0x420] sm:$0xff]
      %v339 = vld [vmem:[%s189 + $0x428] sm:$0xff]
      %v340 = vld [vmem:[%s189 + $0x430] sm:$0xff]
      %v341 = vld [vmem:[%s189 + $0x438] sm:$0xff]
      %v342 = vld [vmem:[%s189 + $0x440] sm:$0xff]
      %v343 = vld [vmem:[%s189 + $0x448] sm:$0xff]
      %v344 = vld [vmem:[%s189 + $0x450] sm:$0xff]
      %v345 = vld [vmem:[%s189 + $0x458] sm:$0xff]
      %v346 = vld [vmem:[%s189 + $0x460] sm:$0xff]
      %v347 = vld [vmem:[%s189 + $0x468] sm:$0xff]
      %v348 = vld [vmem:[%s189 + $0x470] sm:$0xff]
      %v349 = vld [vmem:[%s189 + $0x478] sm:$0xff]
      %v350 = vld [vmem:[%s189 + $0x480] sm:$0xff]
      %v351 = vld [vmem:[%s189 + $0x488] sm:$0xff]
      %v352 = vld [vmem:[%s189 + $0x490] sm:$0xff]
      %v353 = vld [vmem:[%s189 + $0x498] sm:$0xff]
      %v354 = vld [vmem:[%s189 + $0x4a0] sm:$0xff]
      %v355 = vld [vmem:[%s189 + $0x4a8] sm:$0xff]
      %v356 = vld [vmem:[%s189 + $0x4b0] sm:$0xff]
      %v357 = vld [vmem:[%s189 + $0x4b8] sm:$0xff]
      %v358 = vld [vmem:[%s189 + $0x4c0] sm:$0xff]
      %v359 = vld [vmem:[%s189 + $0x4c8] sm:$0xff]
      %v360 = vld [vmem:[%s189 + $0x4d0] sm:$0xff]
      %v361 = vld [vmem:[%s189 + $0x4d8] sm:$0xff]
      %v362 = vld [vmem:[%s189 + $0x4e0] sm:$0xff]
      %v363 = vld [vmem:[%s189 + $0x4e8] sm:$0xff]
      %v364 = vld [vmem:[%s189 + $0x4f0] sm:$0xff]
      %v365 = vld [vmem:[%s189 + $0x4f8] sm:$0xff]
      %v366 = vld [vmem:[%s189 + $0x500] sm:$0xff]
      %v367 = vld [vmem:[%s189 + $0x508] sm:$0xff]
      %v368 = vld [vmem:[%s189 + $0x510] sm:$0xff]
      %v369 = vld [vmem:[%s189 + $0x518] sm:$0xff]
      %v370 = vld [vmem:[%s189 + $0x520] sm:$0xff]
      %v371 = vld [vmem:[%s189 + $0x528] sm:$0xff]
      %v372 = vld [vmem:[%s189 + $0x530] sm:$0xff]
      %v373 = vld [vmem:[%s189 + $0x538] sm:$0xff]
      %v374 = vld [vmem:[%s189 + $0x540] sm:$0xff]
      %v375 = vld [vmem:[%s189 + $0x548] sm:$0xff]
      %v376 = vld [vmem:[%s189 + $0x550] sm:$0xff]
      %v377 = vld [vmem:[%s189 + $0x558] sm:$0xff]
      %v378 = vld [vmem:[%s189 + $0x560] sm:$0xff]
      %v379 = vld [vmem:[%s189 + $0x568] sm:$0xff]
      %v380 = vld [vmem:[%s189 + $0x570] sm:$0xff]
      %v381 = vld [vmem:[%s189 + $0x578] sm:$0xff]
      %v382 = vld [vmem:[%s189 + $0x580] sm:$0xff]
      %v383 = vld [vmem:[%s189 + $0x588] sm:$0xff]
      %v384 = vld [vmem:[%s189 + $0x590] sm:$0xff]
      %v385 = vld [vmem:[%s189 + $0x598] sm:$0xff]
      %v386 = vld [vmem:[%s189 + $0x5a0] sm:$0xff]
      %v387 = vld [vmem:[%s189 + $0x5a8] sm:$0xff]
      %v388 = vld [vmem:[%s189 + $0x5b0] sm:$0xff]
      %v389 = vld [vmem:[%s189 + $0x5b8] sm:$0xff]
      %v390 = vld [vmem:[%s189 + $0x5c0] sm:$0xff]
      %v391 = vld [vmem:[%s189 + $0x5c8] sm:$0xff]
      %v392 = vld [vmem:[%s189 + $0x5d0] sm:$0xff]
      %v393 = vld [vmem:[%s189 + $0x5d8] sm:$0xff]
      %v394 = vld [vmem:[%s189 + $0x5e0] sm:$0xff]
      %v395 = vld [vmem:[%s189 + $0x5e8] sm:$0xff]
      %v396 = vld [vmem:[%s189 + $0x5f0] sm:$0xff]
      %v397 = vld [vmem:[%s189 + $0x5f8] sm:$0xff]
      %v398 = vld [vmem:[%s189 + $0x600] sm:$0xff]
      %v399 = vld [vmem:[%s189 + $0x608] sm:$0xff]
      %v400 = vld [vmem:[%s189 + $0x610] sm:$0xff]
      %v401 = vld [vmem:[%s189 + $0x618] sm:$0xff]
      %v402 = vld [vmem:[%s189 + $0x620] sm:$0xff]
      %v403 = vld [vmem:[%s189 + $0x628] sm:$0xff]
      %v404 = vld [vmem:[%s189 + $0x630] sm:$0xff]
      %v405 = vld [vmem:[%s189 + $0x638] sm:$0xff]
      %v406 = vld [vmem:[%s189 + $0x640] sm:$0xff]
      %v407 = vld [vmem:[%s189 + $0x648] sm:$0xff]
      %v408 = vld [vmem:[%s189 + $0x650] sm:$0xff]
      %v409 = vld [vmem:[%s189 + $0x658] sm:$0xff]
      %v410 = vld [vmem:[%s189 + $0x660] sm:$0xff]
      %v411 = vld [vmem:[%s189 + $0x668] sm:$0xff]
      %v412 = vld [vmem:[%s189 + $0x670] sm:$0xff]
      %v413 = vld [vmem:[%s189 + $0x678] sm:$0xff]
      %v414 = vld [vmem:[%s189 + $0x680] sm:$0xff]
      %v415 = vld [vmem:[%s189 + $0x688] sm:$0xff]
      %v416 = vld [vmem:[%s189 + $0x690] sm:$0xff]
      %v417 = vld [vmem:[%s189 + $0x698] sm:$0xff]
      %v418 = vld [vmem:[%s189 + $0x6a0] sm:$0xff]
      %v419 = vld [vmem:[%s189 + $0x6a8] sm:$0xff]
      %v420 = vld [vmem:[%s189 + $0x6b0] sm:$0xff]
      %v421 = vld [vmem:[%s189 + $0x6b8] sm:$0xff]
      %v422 = vld [vmem:[%s189 + $0x6c0] sm:$0xff]
      %v423 = vld [vmem:[%s189 + $0x6c8] sm:$0xff]
      %v424 = vld [vmem:[%s189 + $0x6d0] sm:$0xff]
      %v425 = vld [vmem:[%s189 + $0x6d8] sm:$0xff]
      %v426 = vld [vmem:[%s189 + $0x6e0] sm:$0xff]
      %v427 = vld [vmem:[%s189 + $0x6e8] sm:$0xff]
      %v428 = vld [vmem:[%s189 + $0x6f0] sm:$0xff]
      %v429 = vld [vmem:[%s189 + $0x6f8] sm:$0xff]
      %v430 = vld [vmem:[%s189 + $0x700] sm:$0xff]
      %v431 = vld [vmem:[%s189 + $0x708] sm:$0xff]
      %v432 = vld [vmem:[%s189 + $0x710] sm:$0xff]
      %v433 = vld [vmem:[%s189 + $0x718] sm:$0xff]
      %v434 = vld [vmem:[%s189 + $0x720] sm:$0xff]
      %v435 = vld [vmem:[%s189 + $0x728] sm:$0xff]
      %v436 = vld [vmem:[%s189 + $0x730] sm:$0xff]
      %v437 = vld [vmem:[%s189 + $0x738] sm:$0xff]
      %v438 = vld [vmem:[%s189 + $0x740] sm:$0xff]
      %v439 = vld [vmem:[%s189 + $0x748] sm:$0xff]
      %v440 = vld [vmem:[%s189 + $0x750] sm:$0xff]
      %v441 = vld [vmem:[%s189 + $0x758] sm:$0xff]
      %v442 = vld [vmem:[%s189 + $0x760] sm:$0xff]
      %v443 = vld [vmem:[%s189 + $0x768] sm:$0xff]
      %v444 = vld [vmem:[%s189 + $0x770] sm:$0xff]
      %v445 = vld [vmem:[%s189 + $0x778] sm:$0xff]
      %v446 = vld [vmem:[%s189 + $0x780] sm:$0xff]
      %v447 = vld [vmem:[%s189 + $0x788] sm:$0xff]
      %v448 = vld [vmem:[%s189 + $0x790] sm:$0xff]
      %v449 = vld [vmem:[%s189 + $0x798] sm:$0xff]
      %v450 = vld [vmem:[%s189 + $0x7a0] sm:$0xff]
      %v451 = vld [vmem:[%s189 + $0x7a8] sm:$0xff]
      %v452 = vld [vmem:[%s189 + $0x7b0] sm:$0xff]
      %v453 = vld [vmem:[%s189 + $0x7b8] sm:$0xff]
      %v454 = vld [vmem:[%s189 + $0x7c0] sm:$0xff]
      %v455 = vld [vmem:[%s189 + $0x7c8] sm:$0xff]
      %v456 = vld [vmem:[%s189 + $0x7d0] sm:$0xff]
      %v457 = vld [vmem:[%s189 + $0x7d8] sm:$0xff]
      %v458 = vld [vmem:[%s189 + $0x7e0] sm:$0xff]
      %v459 = vld [vmem:[%s189 + $0x7e8] sm:$0xff]
      %v460 = vld [vmem:[%s189 + $0x7f0] sm:$0xff]
      %v461 = vld [vmem:[%s189 + $0x7f8] sm:$0xff]
      %v462 = vld [vmem:[%s196] sm:$0xff]
      %v463 = vld [vmem:[%s196 + $0x8] sm:$0xff]
      %v464 = vld [vmem:[%s196 + $0x10] sm:$0xff]
      %v465 = vld [vmem:[%s196 + $0x18] sm:$0xff]
      %v466 = vld [vmem:[%s196 + $0x20] sm:$0xff]
      %v467 = vld [vmem:[%s196 + $0x28] sm:$0xff]
      %v468 = vld [vmem:[%s196 + $0x30] sm:$0xff]
      %v469 = vld [vmem:[%s196 + $0x38] sm:$0xff]
      %v470 = vld [vmem:[%s196 + $0x40] sm:$0xff]
      %v471 = vld [vmem:[%s196 + $0x48] sm:$0xff]
      %v472 = vld [vmem:[%s196 + $0x50] sm:$0xff]
      %v473 = vld [vmem:[%s196 + $0x58] sm:$0xff]
      %v474 = vld [vmem:[%s196 + $0x60] sm:$0xff]
      %v475 = vld [vmem:[%s196 + $0x68] sm:$0xff]
      %v476 = vld [vmem:[%s196 + $0x70] sm:$0xff]
      %v477 = vld [vmem:[%s196 + $0x78] sm:$0xff]
      %v478 = vld [vmem:[%s196 + $0x80] sm:$0xff]
      %v479 = vld [vmem:[%s196 + $0x88] sm:$0xff]
      %v480 = vld [vmem:[%s196 + $0x90] sm:$0xff]
      %v481 = vld [vmem:[%s196 + $0x98] sm:$0xff]
      %v482 = vld [vmem:[%s196 + $0xa0] sm:$0xff]
      %v483 = vld [vmem:[%s196 + $0xa8] sm:$0xff]
      %v484 = vld [vmem:[%s196 + $0xb0] sm:$0xff]
      %v485 = vld [vmem:[%s196 + $0xb8] sm:$0xff]
      %v486 = vld [vmem:[%s196 + $0xc0] sm:$0xff]
      %v487 = vld [vmem:[%s196 + $0xc8] sm:$0xff]
      %v488 = vld [vmem:[%s196 + $0xd0] sm:$0xff]
      %v489 = vld [vmem:[%s196 + $0xd8] sm:$0xff]
      %v490 = vld [vmem:[%s196 + $0xe0] sm:$0xff]
      %v491 = vld [vmem:[%s196 + $0xe8] sm:$0xff]
      %v492 = vld [vmem:[%s196 + $0xf0] sm:$0xff]
      %v493 = vld [vmem:[%s196 + $0xf8] sm:$0xff]
      %v494 = vld [vmem:[%s196 + $0x100] sm:$0xff]
      %v495 = vld [vmem:[%s196 + $0x108] sm:$0xff]
      %v496 = vld [vmem:[%s196 + $0x110] sm:$0xff]
      %v497 = vld [vmem:[%s196 + $0x118] sm:$0xff]
      %v498 = vld [vmem:[%s196 + $0x120] sm:$0xff]
      %v499 = vld [vmem:[%s196 + $0x128] sm:$0xff]
      %v500 = vld [vmem:[%s196 + $0x130] sm:$0xff]
      %v501 = vld [vmem:[%s196 + $0x138] sm:$0xff]
      %v502 = vld [vmem:[%s196 + $0x140] sm:$0xff]
      %v503 = vld [vmem:[%s196 + $0x148] sm:$0xff]
      %v504 = vld [vmem:[%s196 + $0x150] sm:$0xff]
      %v505 = vld [vmem:[%s196 + $0x158] sm:$0xff]
      %v506 = vld [vmem:[%s196 + $0x160] sm:$0xff]
      %v507 = vld [vmem:[%s196 + $0x168] sm:$0xff]
      %v508 = vld [vmem:[%s196 + $0x170] sm:$0xff]
      %v509 = vld [vmem:[%s196 + $0x178] sm:$0xff]
      %v510 = vld [vmem:[%s196 + $0x180] sm:$0xff]
      %v511 = vld [vmem:[%s196 + $0x188] sm:$0xff]
      %v512 = vld [vmem:[%s196 + $0x190] sm:$0xff]
      %v513 = vld [vmem:[%s196 + $0x198] sm:$0xff]
      %v514 = vld [vmem:[%s196 + $0x1a0] sm:$0xff]
      %v515 = vld [vmem:[%s196 + $0x1a8] sm:$0xff]
      %v516 = vld [vmem:[%s196 + $0x1b0] sm:$0xff]
      %v517 = vld [vmem:[%s196 + $0x1b8] sm:$0xff]
      %v518 = vld [vmem:[%s196 + $0x1c0] sm:$0xff]
      %v519 = vld [vmem:[%s196 + $0x1c8] sm:$0xff]
      %v520 = vld [vmem:[%s196 + $0x1d0] sm:$0xff]
      %v521 = vld [vmem:[%s196 + $0x1d8] sm:$0xff]
      %v522 = vld [vmem:[%s196 + $0x1e0] sm:$0xff]
      %v523 = vld [vmem:[%s196 + $0x1e8] sm:$0xff]
      %v524 = vld [vmem:[%s196 + $0x1f0] sm:$0xff]
      %v525 = vld [vmem:[%s196 + $0x1f8] sm:$0xff]
      %v526 = vld [vmem:[%s196 + $0x200] sm:$0xff]
      %v527 = vld [vmem:[%s196 + $0x208] sm:$0xff]
      %v528 = vld [vmem:[%s196 + $0x210] sm:$0xff]
      %v529 = vld [vmem:[%s196 + $0x218] sm:$0xff]
      %v530 = vld [vmem:[%s196 + $0x220] sm:$0xff]
      %v531 = vld [vmem:[%s196 + $0x228] sm:$0xff]
      %v532 = vld [vmem:[%s196 + $0x230] sm:$0xff]
      %v533 = vld [vmem:[%s196 + $0x238] sm:$0xff]
      %v534 = vld [vmem:[%s196 + $0x240] sm:$0xff]
      %v535 = vld [vmem:[%s196 + $0x248] sm:$0xff]
      %v536 = vld [vmem:[%s196 + $0x250] sm:$0xff]
      %v537 = vld [vmem:[%s196 + $0x258] sm:$0xff]
      %v538 = vld [vmem:[%s196 + $0x260] sm:$0xff]
      %v539 = vld [vmem:[%s196 + $0x268] sm:$0xff]
      %v540 = vld [vmem:[%s196 + $0x270] sm:$0xff]
      %v541 = vld [vmem:[%s196 + $0x278] sm:$0xff]
      %v542 = vld [vmem:[%s196 + $0x280] sm:$0xff]
      %v543 = vld [vmem:[%s196 + $0x288] sm:$0xff]
      %v544 = vld [vmem:[%s196 + $0x290] sm:$0xff]
      %v545 = vld [vmem:[%s196 + $0x298] sm:$0xff]
      %v546 = vld [vmem:[%s196 + $0x2a0] sm:$0xff]
      %v547 = vld [vmem:[%s196 + $0x2a8] sm:$0xff]
      %v548 = vld [vmem:[%s196 + $0x2b0] sm:$0xff]
      %v549 = vld [vmem:[%s196 + $0x2b8] sm:$0xff]
      %v550 = vld [vmem:[%s196 + $0x2c0] sm:$0xff]
      %v551 = vld [vmem:[%s196 + $0x2c8] sm:$0xff]
      %v552 = vld [vmem:[%s196 + $0x2d0] sm:$0xff]
      %v553 = vld [vmem:[%s196 + $0x2d8] sm:$0xff]
      %v554 = vld [vmem:[%s196 + $0x2e0] sm:$0xff]
      %v555 = vld [vmem:[%s196 + $0x2e8] sm:$0xff]
      %v556 = vld [vmem:[%s196 + $0x2f0] sm:$0xff]
      %v557 = vld [vmem:[%s196 + $0x2f8] sm:$0xff]
      %v558 = vld [vmem:[%s196 + $0x300] sm:$0xff]
      %v559 = vld [vmem:[%s196 + $0x308] sm:$0xff]
      %v560 = vld [vmem:[%s196 + $0x310] sm:$0xff]
      %v561 = vld [vmem:[%s196 + $0x318] sm:$0xff]
      %v562 = vld [vmem:[%s196 + $0x320] sm:$0xff]
      %v563 = vld [vmem:[%s196 + $0x328] sm:$0xff]
      %v564 = vld [vmem:[%s196 + $0x330] sm:$0xff]
      %v565 = vld [vmem:[%s196 + $0x338] sm:$0xff]
      %v566 = vld [vmem:[%s196 + $0x340] sm:$0xff]
      %v567 = vld [vmem:[%s196 + $0x348] sm:$0xff]
      %v568 = vld [vmem:[%s196 + $0x350] sm:$0xff]
      %v569 = vld [vmem:[%s196 + $0x358] sm:$0xff]
      %v570 = vld [vmem:[%s196 + $0x360] sm:$0xff]
      %v571 = vld [vmem:[%s196 + $0x368] sm:$0xff]
      %v572 = vld [vmem:[%s196 + $0x370] sm:$0xff]
      %v573 = vld [vmem:[%s196 + $0x378] sm:$0xff]
      %v574 = vld [vmem:[%s196 + $0x380] sm:$0xff]
      %v575 = vld [vmem:[%s196 + $0x388] sm:$0xff]
      %v576 = vld [vmem:[%s196 + $0x390] sm:$0xff]
      %v577 = vld [vmem:[%s196 + $0x398] sm:$0xff]
      %v578 = vld [vmem:[%s196 + $0x3a0] sm:$0xff]
      %v579 = vld [vmem:[%s196 + $0x3a8] sm:$0xff]
      %v580 = vld [vmem:[%s196 + $0x3b0] sm:$0xff]
      %v581 = vld [vmem:[%s196 + $0x3b8] sm:$0xff]
      %v582 = vld [vmem:[%s196 + $0x3c0] sm:$0xff]
      %v583 = vld [vmem:[%s196 + $0x3c8] sm:$0xff]
      %v584 = vld [vmem:[%s196 + $0x3d0] sm:$0xff]
      %v585 = vld [vmem:[%s196 + $0x3d8] sm:$0xff]
      %v586 = vld [vmem:[%s196 + $0x3e0] sm:$0xff]
      %v587 = vld [vmem:[%s196 + $0x3e8] sm:$0xff]
      %v588 = vld [vmem:[%s196 + $0x3f0] sm:$0xff]
      %v589 = vld [vmem:[%s196 + $0x3f8] sm:$0xff]
      %v590 = vld [vmem:[%s196 + $0x400] sm:$0xff]
      %v591 = vld [vmem:[%s196 + $0x408] sm:$0xff]
      %v592 = vld [vmem:[%s196 + $0x410] sm:$0xff]
      %v593 = vld [vmem:[%s196 + $0x418] sm:$0xff]
      %v594 = vld [vmem:[%s196 + $0x420] sm:$0xff]
      %v595 = vld [vmem:[%s196 + $0x428] sm:$0xff]
      %v596 = vld [vmem:[%s196 + $0x430] sm:$0xff]
      %v597 = vld [vmem:[%s196 + $0x438] sm:$0xff]
      %v598 = vld [vmem:[%s196 + $0x440] sm:$0xff]
      %v599 = vld [vmem:[%s196 + $0x448] sm:$0xff]
      %v600 = vld [vmem:[%s196 + $0x450] sm:$0xff]
      %v601 = vld [vmem:[%s196 + $0x458] sm:$0xff]
      %v602 = vld [vmem:[%s196 + $0x460] sm:$0xff]
      %v603 = vld [vmem:[%s196 + $0x468] sm:$0xff]
      %v604 = vld [vmem:[%s196 + $0x470] sm:$0xff]
      %v605 = vld [vmem:[%s196 + $0x478] sm:$0xff]
      %v606 = vld [vmem:[%s196 + $0x480] sm:$0xff]
      %v607 = vld [vmem:[%s196 + $0x488] sm:$0xff]
      %v608 = vld [vmem:[%s196 + $0x490] sm:$0xff]
      %v609 = vld [vmem:[%s196 + $0x498] sm:$0xff]
      %v610 = vld [vmem:[%s196 + $0x4a0] sm:$0xff]
      %v611 = vld [vmem:[%s196 + $0x4a8] sm:$0xff]
      %v612 = vld [vmem:[%s196 + $0x4b0] sm:$0xff]
      %v613 = vld [vmem:[%s196 + $0x4b8] sm:$0xff]
      %v614 = vld [vmem:[%s196 + $0x4c0] sm:$0xff]
      %v615 = vld [vmem:[%s196 + $0x4c8] sm:$0xff]
      %v616 = vld [vmem:[%s196 + $0x4d0] sm:$0xff]
      %v617 = vld [vmem:[%s196 + $0x4d8] sm:$0xff]
      %v618 = vld [vmem:[%s196 + $0x4e0] sm:$0xff]
      %v619 = vld [vmem:[%s196 + $0x4e8] sm:$0xff]
      %v620 = vld [vmem:[%s196 + $0x4f0] sm:$0xff]
      %v621 = vld [vmem:[%s196 + $0x4f8] sm:$0xff]
      %v622 = vld [vmem:[%s196 + $0x500] sm:$0xff]
      %v623 = vld [vmem:[%s196 + $0x508] sm:$0xff]
      %v624 = vld [vmem:[%s196 + $0x510] sm:$0xff]
      %v625 = vld [vmem:[%s196 + $0x518] sm:$0xff]
      %v626 = vld [vmem:[%s196 + $0x520] sm:$0xff]
      %v627 = vld [vmem:[%s196 + $0x528] sm:$0xff]
      %v628 = vld [vmem:[%s196 + $0x530] sm:$0xff]
      %v629 = vld [vmem:[%s196 + $0x538] sm:$0xff]
      %v630 = vld [vmem:[%s196 + $0x540] sm:$0xff]
      %v631 = vld [vmem:[%s196 + $0x548] sm:$0xff]
      %v632 = vld [vmem:[%s196 + $0x550] sm:$0xff]
      %v633 = vld [vmem:[%s196 + $0x558] sm:$0xff]
      %v634 = vld [vmem:[%s196 + $0x560] sm:$0xff]
      %v635 = vld [vmem:[%s196 + $0x568] sm:$0xff]
      %v636 = vld [vmem:[%s196 + $0x570] sm:$0xff]
      %v637 = vld [vmem:[%s196 + $0x578] sm:$0xff]
      %v638 = vld [vmem:[%s196 + $0x580] sm:$0xff]
      %v639 = vld [vmem:[%s196 + $0x588] sm:$0xff]
      %v640 = vld [vmem:[%s196 + $0x590] sm:$0xff]
      %v641 = vld [vmem:[%s196 + $0x598] sm:$0xff]
      %v642 = vld [vmem:[%s196 + $0x5a0] sm:$0xff]
      %v643 = vld [vmem:[%s196 + $0x5a8] sm:$0xff]
      %v644 = vld [vmem:[%s196 + $0x5b0] sm:$0xff]
      %v645 = vld [vmem:[%s196 + $0x5b8] sm:$0xff]
      %v646 = vld [vmem:[%s196 + $0x5c0] sm:$0xff]
      %v647 = vld [vmem:[%s196 + $0x5c8] sm:$0xff]
      %v648 = vld [vmem:[%s196 + $0x5d0] sm:$0xff]
      %v649 = vld [vmem:[%s196 + $0x5d8] sm:$0xff]
      %v650 = vld [vmem:[%s196 + $0x5e0] sm:$0xff]
      %v651 = vld [vmem:[%s196 + $0x5e8] sm:$0xff]
      %v652 = vld [vmem:[%s196 + $0x5f0] sm:$0xff]
      %v653 = vld [vmem:[%s196 + $0x5f8] sm:$0xff]
      %v654 = vld [vmem:[%s196 + $0x600] sm:$0xff]
      %v655 = vld [vmem:[%s196 + $0x608] sm:$0xff]
      %v656 = vld [vmem:[%s196 + $0x610] sm:$0xff]
      %v657 = vld [vmem:[%s196 + $0x618] sm:$0xff]
      %v658 = vld [vmem:[%s196 + $0x620] sm:$0xff]
      %v659 = vld [vmem:[%s196 + $0x628] sm:$0xff]
      %v660 = vld [vmem:[%s196 + $0x630] sm:$0xff]
      %v661 = vld [vmem:[%s196 + $0x638] sm:$0xff]
      %v662 = vld [vmem:[%s196 + $0x640] sm:$0xff]
      %v663 = vld [vmem:[%s196 + $0x648] sm:$0xff]
      %v664 = vld [vmem:[%s196 + $0x650] sm:$0xff]
      %v665 = vld [vmem:[%s196 + $0x658] sm:$0xff]
      %v666 = vld [vmem:[%s196 + $0x660] sm:$0xff]
      %v667 = vld [vmem:[%s196 + $0x668] sm:$0xff]
      %v668 = vld [vmem:[%s196 + $0x670] sm:$0xff]
      %v669 = vld [vmem:[%s196 + $0x678] sm:$0xff]
      %v670 = vld [vmem:[%s196 + $0x680] sm:$0xff]
      %v671 = vld [vmem:[%s196 + $0x688] sm:$0xff]
      %v672 = vld [vmem:[%s196 + $0x690] sm:$0xff]
      %v673 = vld [vmem:[%s196 + $0x698] sm:$0xff]
      %v674 = vld [vmem:[%s196 + $0x6a0] sm:$0xff]
      %v675 = vld [vmem:[%s196 + $0x6a8] sm:$0xff]
      %v676 = vld [vmem:[%s196 + $0x6b0] sm:$0xff]
      %v677 = vld [vmem:[%s196 + $0x6b8] sm:$0xff]
      %v678 = vld [vmem:[%s196 + $0x6c0] sm:$0xff]
      %v679 = vld [vmem:[%s196 + $0x6c8] sm:$0xff]
      %v680 = vld [vmem:[%s196 + $0x6d0] sm:$0xff]
      %v681 = vld [vmem:[%s196 + $0x6d8] sm:$0xff]
      %v682 = vld [vmem:[%s196 + $0x6e0] sm:$0xff]
      %v683 = vld [vmem:[%s196 + $0x6e8] sm:$0xff]
      %v684 = vld [vmem:[%s196 + $0x6f0] sm:$0xff]
      %v685 = vld [vmem:[%s196 + $0x6f8] sm:$0xff]
      %v686 = vld [vmem:[%s196 + $0x700] sm:$0xff]
      %v687 = vld [vmem:[%s196 + $0x708] sm:$0xff]
      %v688 = vld [vmem:[%s196 + $0x710] sm:$0xff]
      %v689 = vld [vmem:[%s196 + $0x718] sm:$0xff]
      %v690 = vld [vmem:[%s196 + $0x720] sm:$0xff]
      %v691 = vld [vmem:[%s196 + $0x728] sm:$0xff]
      %v692 = vld [vmem:[%s196 + $0x730] sm:$0xff]
      %v693 = vld [vmem:[%s196 + $0x738] sm:$0xff]
      %v694 = vld [vmem:[%s196 + $0x740] sm:$0xff]
      %v695 = vld [vmem:[%s196 + $0x748] sm:$0xff]
      %v696 = vld [vmem:[%s196 + $0x750] sm:$0xff]
      %v697 = vld [vmem:[%s196 + $0x758] sm:$0xff]
      %v698 = vld [vmem:[%s196 + $0x760] sm:$0xff]
      %v699 = vld [vmem:[%s196 + $0x768] sm:$0xff]
      %v700 = vld [vmem:[%s196 + $0x770] sm:$0xff]
      %v701 = vld [vmem:[%s196 + $0x778] sm:$0xff]
      %v702 = vld [vmem:[%s196 + $0x780] sm:$0xff]
      %v703 = vld [vmem:[%s196 + $0x788] sm:$0xff]
      %v704 = vld [vmem:[%s196 + $0x790] sm:$0xff]
      %v705 = vld [vmem:[%s196 + $0x798] sm:$0xff]
      %v706 = vld [vmem:[%s196 + $0x7a0] sm:$0xff]
      %v707 = vld [vmem:[%s196 + $0x7a8] sm:$0xff]
      %v708 = vld [vmem:[%s196 + $0x7b0] sm:$0xff]
      %v709 = vld [vmem:[%s196 + $0x7b8] sm:$0xff]
      %v710 = vld [vmem:[%s196 + $0x7c0] sm:$0xff]
      %v711 = vld [vmem:[%s196 + $0x7c8] sm:$0xff]
      %v712 = vld [vmem:[%s196 + $0x7d0] sm:$0xff]
      %v713 = vld [vmem:[%s196 + $0x7d8] sm:$0xff]
      %v714 = vld [vmem:[%s196 + $0x7e0] sm:$0xff]
      %v715 = vld [vmem:[%s196 + $0x7e8] sm:$0xff]
      %v716 = vld [vmem:[%s196 + $0x7f0] sm:$0xff]
      %v717 = vld [vmem:[%s196 + $0x7f8] sm:$0xff]
      %v718 = vstv %s205
      %v719 = vmul.f32 %v718, %v206
      %v720 = vmul.f32 %v718, %v207
      %v721 = vmul.f32 %v718, %v208
      %v722 = vmul.f32 %v718, %v209
      %v723 = vmul.f32 %v718, %v210
      %v724 = vmul.f32 %v718, %v211
      %v725 = vmul.f32 %v718, %v212
      %v726 = vmul.f32 %v718, %v213
      %v727 = vmul.f32 %v718, %v214
      %v728 = vmul.f32 %v718, %v215
      %v729 = vmul.f32 %v718, %v216
      %v730 = vmul.f32 %v718, %v217
      %v731 = vmul.f32 %v718, %v218
      %v732 = vmul.f32 %v718, %v219
      %v733 = vmul.f32 %v718, %v220
      %v734 = vmul.f32 %v718, %v221
      %v735 = vmul.f32 %v718, %v222
      %v736 = vmul.f32 %v718, %v223
      %v737 = vmul.f32 %v718, %v224
      %v738 = vmul.f32 %v718, %v225
      %v739 = vmul.f32 %v718, %v226
      %v740 = vmul.f32 %v718, %v227
      %v741 = vmul.f32 %v718, %v228
      %v742 = vmul.f32 %v718, %v229
      %v743 = vmul.f32 %v718, %v230
      %v744 = vmul.f32 %v718, %v231
      %v745 = vmul.f32 %v718, %v232
      %v746 = vmul.f32 %v718, %v233
      %v747 = vmul.f32 %v718, %v234
      %v748 = vmul.f32 %v718, %v235
      %v749 = vmul.f32 %v718, %v236
      %v750 = vmul.f32 %v718, %v237
      %v751 = vmul.f32 %v718, %v238
      %v752 = vmul.f32 %v718, %v239
      %v753 = vmul.f32 %v718, %v240
      %v754 = vmul.f32 %v718, %v241
      %v755 = vmul.f32 %v718, %v242
      %v756 = vmul.f32 %v718, %v243
      %v757 = vmul.f32 %v718, %v244
      %v758 = vmul.f32 %v718, %v245
      %v759 = vmul.f32 %v718, %v246
      %v760 = vmul.f32 %v718, %v247
      %v761 = vmul.f32 %v718, %v248
      %v762 = vmul.f32 %v718, %v249
      %v763 = vmul.f32 %v718, %v250
      %v764 = vmul.f32 %v718, %v251
      %v765 = vmul.f32 %v718, %v252
      %v766 = vmul.f32 %v718, %v253
      %v767 = vmul.f32 %v718, %v254
      %v768 = vmul.f32 %v718, %v255
      %v769 = vmul.f32 %v718, %v256
      %v770 = vmul.f32 %v718, %v257
      %v771 = vmul.f32 %v718, %v258
      %v772 = vmul.f32 %v718, %v259
      %v773 = vmul.f32 %v718, %v260
      %v774 = vmul.f32 %v718, %v261
      %v775 = vmul.f32 %v718, %v262
      %v776 = vmul.f32 %v718, %v263
      %v777 = vmul.f32 %v718, %v264
      %v778 = vmul.f32 %v718, %v265
      %v779 = vmul.f32 %v718, %v266
      %v780 = vmul.f32 %v718, %v267
      %v781 = vmul.f32 %v718, %v268
      %v782 = vmul.f32 %v718, %v269
      %v783 = vmul.f32 %v718, %v270
      %v784 = vmul.f32 %v718, %v271
      %v785 = vmul.f32 %v718, %v272
      %v786 = vmul.f32 %v718, %v273
      %v787 = vmul.f32 %v718, %v274
      %v788 = vmul.f32 %v718, %v275
      %v789 = vmul.f32 %v718, %v276
      %v790 = vmul.f32 %v718, %v277
      %v791 = vmul.f32 %v718, %v278
      %v792 = vmul.f32 %v718, %v279
      %v793 = vmul.f32 %v718, %v280
      %v794 = vmul.f32 %v718, %v281
      %v795 = vmul.f32 %v718, %v282
      %v796 = vmul.f32 %v718, %v283
      %v797 = vmul.f32 %v718, %v284
      %v798 = vmul.f32 %v718, %v285
      %v799 = vmul.f32 %v718, %v286
      %v800 = vmul.f32 %v718, %v287
      %v801 = vmul.f32 %v718, %v288
      %v802 = vmul.f32 %v718, %v289
      %v803 = vmul.f32 %v718, %v290
      %v804 = vmul.f32 %v718, %v291
      %v805 = vmul.f32 %v718, %v292
      %v806 = vmul.f32 %v718, %v293
      %v807 = vmul.f32 %v718, %v294
      %v808 = vmul.f32 %v718, %v295
      %v809 = vmul.f32 %v718, %v296
      %v810 = vmul.f32 %v718, %v297
      %v811 = vmul.f32 %v718, %v298
      %v812 = vmul.f32 %v718, %v299
      %v813 = vmul.f32 %v718, %v300
      %v814 = vmul.f32 %v718, %v301
      %v815 = vmul.f32 %v718, %v302
      %v816 = vmul.f32 %v718, %v303
      %v817 = vmul.f32 %v718, %v304
      %v818 = vmul.f32 %v718, %v305
      %v819 = vmul.f32 %v718, %v306
      %v820 = vmul.f32 %v718, %v307
      %v821 = vmul.f32 %v718, %v308
      %v822 = vmul.f32 %v718, %v309
      %v823 = vmul.f32 %v718, %v310
      %v824 = vmul.f32 %v718, %v311
      %v825 = vmul.f32 %v718, %v312
      %v826 = vmul.f32 %v718, %v313
      %v827 = vmul.f32 %v718, %v314
      %v828 = vmul.f32 %v718, %v315
      %v829 = vmul.f32 %v718, %v316
      %v830 = vmul.f32 %v718, %v317
      %v831 = vmul.f32 %v718, %v318
      %v832 = vmul.f32 %v718, %v319
      %v833 = vmul.f32 %v718, %v320
      %v834 = vmul.f32 %v718, %v321
      %v835 = vmul.f32 %v718, %v322
      %v836 = vmul.f32 %v718, %v323
      %v837 = vmul.f32 %v718, %v324
      %v838 = vmul.f32 %v718, %v325
      %v839 = vmul.f32 %v718, %v326
      %v840 = vmul.f32 %v718, %v327
      %v841 = vmul.f32 %v718, %v328
      %v842 = vmul.f32 %v718, %v329
      %v843 = vmul.f32 %v718, %v330
      %v844 = vmul.f32 %v718, %v331
      %v845 = vmul.f32 %v718, %v332
      %v846 = vmul.f32 %v718, %v333
      %v847 = vmul.f32 %v718, %v334
      %v848 = vmul.f32 %v718, %v335
      %v849 = vmul.f32 %v718, %v336
      %v850 = vmul.f32 %v718, %v337
      %v851 = vmul.f32 %v718, %v338
      %v852 = vmul.f32 %v718, %v339
      %v853 = vmul.f32 %v718, %v340
      %v854 = vmul.f32 %v718, %v341
      %v855 = vmul.f32 %v718, %v342
      %v856 = vmul.f32 %v718, %v343
      %v857 = vmul.f32 %v718, %v344
      %v858 = vmul.f32 %v718, %v345
      %v859 = vmul.f32 %v718, %v346
      %v860 = vmul.f32 %v718, %v347
      %v861 = vmul.f32 %v718, %v348
      %v862 = vmul.f32 %v718, %v349
      %v863 = vmul.f32 %v718, %v350
      %v864 = vmul.f32 %v718, %v351
      %v865 = vmul.f32 %v718, %v352
      %v866 = vmul.f32 %v718, %v353
      %v867 = vmul.f32 %v718, %v354
      %v868 = vmul.f32 %v718, %v355
      %v869 = vmul.f32 %v718, %v356
      %v870 = vmul.f32 %v718, %v357
      %v871 = vmul.f32 %v718, %v358
      %v872 = vmul.f32 %v718, %v359
      %v873 = vmul.f32 %v718, %v360
      %v874 = vmul.f32 %v718, %v361
      %v875 = vmul.f32 %v718, %v362
      %v876 = vmul.f32 %v718, %v363
      %v877 = vmul.f32 %v718, %v364
      %v878 = vmul.f32 %v718, %v365
      %v879 = vmul.f32 %v718, %v366
      %v880 = vmul.f32 %v718, %v367
      %v881 = vmul.f32 %v718, %v368
      %v882 = vmul.f32 %v718, %v369
      %v883 = vmul.f32 %v718, %v370
      %v884 = vmul.f32 %v718, %v371
      %v885 = vmul.f32 %v718, %v372
      %v886 = vmul.f32 %v718, %v373
      %v887 = vmul.f32 %v718, %v374
      %v888 = vmul.f32 %v718, %v375
      %v889 = vmul.f32 %v718, %v376
      %v890 = vmul.f32 %v718, %v377
      %v891 = vmul.f32 %v718, %v378
      %v892 = vmul.f32 %v718, %v379
      %v893 = vmul.f32 %v718, %v380
      %v894 = vmul.f32 %v718, %v381
      %v895 = vmul.f32 %v718, %v382
      %v896 = vmul.f32 %v718, %v383
      %v897 = vmul.f32 %v718, %v384
      %v898 = vmul.f32 %v718, %v385
      %v899 = vmul.f32 %v718, %v386
      %v900 = vmul.f32 %v718, %v387
      %v901 = vmul.f32 %v718, %v388
      %v902 = vmul.f32 %v718, %v389
      %v903 = vmul.f32 %v718, %v390
      %v904 = vmul.f32 %v718, %v391
      %v905 = vmul.f32 %v718, %v392
      %v906 = vmul.f32 %v718, %v393
      %v907 = vmul.f32 %v718, %v394
      %v908 = vmul.f32 %v718, %v395
      %v909 = vmul.f32 %v718, %v396
      %v910 = vmul.f32 %v718, %v397
      %v911 = vmul.f32 %v718, %v398
      %v912 = vmul.f32 %v718, %v399
      %v913 = vmul.f32 %v718, %v400
      %v914 = vmul.f32 %v718, %v401
      %v915 = vmul.f32 %v718, %v402
      %v916 = vmul.f32 %v718, %v403
      %v917 = vmul.f32 %v718, %v404
      %v918 = vmul.f32 %v718, %v405
      %v919 = vmul.f32 %v718, %v406
      %v920 = vmul.f32 %v718, %v407
      %v921 = vmul.f32 %v718, %v408
      %v922 = vmul.f32 %v718, %v409
      %v923 = vmul.f32 %v718, %v410
      %v924 = vmul.f32 %v718, %v411
      %v925 = vmul.f32 %v718, %v412
      %v926 = vmul.f32 %v718, %v413
      %v927 = vmul.f32 %v718, %v414
      %v928 = vmul.f32 %v718, %v415
      %v929 = vmul.f32 %v718, %v416
      %v930 = vmul.f32 %v718, %v417
      %v931 = vmul.f32 %v718, %v418
      %v932 = vmul.f32 %v718, %v419
      %v933 = vmul.f32 %v718, %v420
      %v934 = vmul.f32 %v718, %v421
      %v935 = vmul.f32 %v718, %v422
      %v936 = vmul.f32 %v718, %v423
      %v937 = vmul.f32 %v718, %v424
      %v938 = vmul.f32 %v718, %v425
      %v939 = vmul.f32 %v718, %v426
      %v940 = vmul.f32 %v718, %v427
      %v941 = vmul.f32 %v718, %v428
      %v942 = vmul.f32 %v718, %v429
      %v943 = vmul.f32 %v718, %v430
      %v944 = vmul.f32 %v718, %v431
      %v945 = vmul.f32 %v718, %v432
      %v946 = vmul.f32 %v718, %v433
      %v947 = vmul.f32 %v718, %v434
      %v948 = vmul.f32 %v718, %v435
      %v949 = vmul.f32 %v718, %v436
      %v950 = vmul.f32 %v718, %v437
      %v951 = vmul.f32 %v718, %v438
      %v952 = vmul.f32 %v718, %v439
      %v953 = vmul.f32 %v718, %v440
      %v954 = vmul.f32 %v718, %v441
      %v955 = vmul.f32 %v718, %v442
      %v956 = vmul.f32 %v718, %v443
      %v957 = vmul.f32 %v718, %v444
      %v958 = vmul.f32 %v718, %v445
      %v959 = vmul.f32 %v718, %v446
      %v960 = vmul.f32 %v718, %v447
      %v961 = vmul.f32 %v718, %v448
      %v962 = vmul.f32 %v718, %v449
      %v963 = vmul.f32 %v718, %v450
      %v964 = vmul.f32 %v718, %v451
      %v965 = vmul.f32 %v718, %v452
      %v966 = vmul.f32 %v718, %v453
      %v967 = vmul.f32 %v718, %v454
      %v968 = vmul.f32 %v718, %v455
      %v969 = vmul.f32 %v718, %v456
      %v970 = vmul.f32 %v718, %v457
      %v971 = vmul.f32 %v718, %v458
      %v972 = vmul.f32 %v718, %v459
      %v973 = vmul.f32 %v718, %v460
      %v974 = vmul.f32 %v718, %v461
      %v975 = vadd.f32 %v719, %v462
      %v976 = vadd.f32 %v720, %v463
      %v977 = vadd.f32 %v721, %v464
      %v978 = vadd.f32 %v722, %v465
      %v979 = vadd.f32 %v723, %v466
      %v980 = vadd.f32 %v724, %v467
      %v981 = vadd.f32 %v725, %v468
      %v982 = vadd.f32 %v726, %v469
      %v983 = vadd.f32 %v727, %v470
      %v984 = vadd.f32 %v728, %v471
      %v985 = vadd.f32 %v729, %v472
      %v986 = vadd.f32 %v730, %v473
      %v987 = vadd.f32 %v731, %v474
      %v988 = vadd.f32 %v732, %v475
      %v989 = vadd.f32 %v733, %v476
      %v990 = vadd.f32 %v734, %v477
      %v991 = vadd.f32 %v735, %v478
      %v992 = vadd.f32 %v736, %v479
      %v993 = vadd.f32 %v737, %v480
      %v994 = vadd.f32 %v738, %v481
      %v995 = vadd.f32 %v739, %v482
      %v996 = vadd.f32 %v740, %v483
      %v997 = vadd.f32 %v741, %v484
      %v998 = vadd.f32 %v742, %v485
      %v999 = vadd.f32 %v743, %v486
      %v1000 = vadd.f32 %v744, %v487
      %v1001 = vadd.f32 %v745, %v488
      %v1002 = vadd.f32 %v746, %v489
      %v1003 = vadd.f32 %v747, %v490
      %v1004 = vadd.f32 %v748, %v491
      %v1005 = vadd.f32 %v749, %v492
      %v1006 = vadd.f32 %v750, %v493
      %v1007 = vadd.f32 %v751, %v494
      %v1008 = vadd.f32 %v752, %v495
      %v1009 = vadd.f32 %v753, %v496
      %v1010 = vadd.f32 %v754, %v497
      %v1011 = vadd.f32 %v755, %v498
      %v1012 = vadd.f32 %v756, %v499
      %v1013 = vadd.f32 %v757, %v500
      %v1014 = vadd.f32 %v758, %v501
      %v1015 = vadd.f32 %v759, %v502
      %v1016 = vadd.f32 %v760, %v503
      %v1017 = vadd.f32 %v761, %v504
      %v1018 = vadd.f32 %v762, %v505
      %v1019 = vadd.f32 %v763, %v506
      %v1020 = vadd.f32 %v764, %v507
      %v1021 = vadd.f32 %v765, %v508
      %v1022 = vadd.f32 %v766, %v509
      %v1023 = vadd.f32 %v767, %v510
      %v1024 = vadd.f32 %v768, %v511
      %v1025 = vadd.f32 %v769, %v512
      %v1026 = vadd.f32 %v770, %v513
      %v1027 = vadd.f32 %v771, %v514
      %v1028 = vadd.f32 %v772, %v515
      %v1029 = vadd.f32 %v773, %v516
      %v1030 = vadd.f32 %v774, %v517
      %v1031 = vadd.f32 %v775, %v518
      %v1032 = vadd.f32 %v776, %v519
      %v1033 = vadd.f32 %v777, %v520
      %v1034 = vadd.f32 %v778, %v521
      %v1035 = vadd.f32 %v779, %v522
      %v1036 = vadd.f32 %v780, %v523
      %v1037 = vadd.f32 %v781, %v524
      %v1038 = vadd.f32 %v782, %v525
      %v1039 = vadd.f32 %v783, %v526
      %v1040 = vadd.f32 %v784, %v527
      %v1041 = vadd.f32 %v785, %v528
      %v1042 = vadd.f32 %v786, %v529
      %v1043 = vadd.f32 %v787, %v530
      %v1044 = vadd.f32 %v788, %v531
      %v1045 = vadd.f32 %v789, %v532
      %v1046 = vadd.f32 %v790, %v533
      %v1047 = vadd.f32 %v791, %v534
      %v1048 = vadd.f32 %v792, %v535
      %v1049 = vadd.f32 %v793, %v536
      %v1050 = vadd.f32 %v794, %v537
      %v1051 = vadd.f32 %v795, %v538
      %v1052 = vadd.f32 %v796, %v539
      %v1053 = vadd.f32 %v797, %v540
      %v1054 = vadd.f32 %v798, %v541
      %v1055 = vadd.f32 %v799, %v542
      %v1056 = vadd.f32 %v800, %v543
      %v1057 = vadd.f32 %v801, %v544
      %v1058 = vadd.f32 %v802, %v545
      %v1059 = vadd.f32 %v803, %v546
      %v1060 = vadd.f32 %v804, %v547
      %v1061 = vadd.f32 %v805, %v548
      %v1062 = vadd.f32 %v806, %v549
      %v1063 = vadd.f32 %v807, %v550
      %v1064 = vadd.f32 %v808, %v551
      %v1065 = vadd.f32 %v809, %v552
      %v1066 = vadd.f32 %v810, %v553
      %v1067 = vadd.f32 %v811, %v554
      %v1068 = vadd.f32 %v812, %v555
      %v1069 = vadd.f32 %v813, %v556
      %v1070 = vadd.f32 %v814, %v557
      %v1071 = vadd.f32 %v815, %v558
      %v1072 = vadd.f32 %v816, %v559
      %v1073 = vadd.f32 %v817, %v560
      %v1074 = vadd.f32 %v818, %v561
      %v1075 = vadd.f32 %v819, %v562
      %v1076 = vadd.f32 %v820, %v563
      %v1077 = vadd.f32 %v821, %v564
      %v1078 = vadd.f32 %v822, %v565
      %v1079 = vadd.f32 %v823, %v566
      %v1080 = vadd.f32 %v824, %v567
      %v1081 = vadd.f32 %v825, %v568
      %v1082 = vadd.f32 %v826, %v569
      %v1083 = vadd.f32 %v827, %v570
      %v1084 = vadd.f32 %v828, %v571
      %v1085 = vadd.f32 %v829, %v572
      %v1086 = vadd.f32 %v830, %v573
      %v1087 = vadd.f32 %v831, %v574
      %v1088 = vadd.f32 %v832, %v575
      %v1089 = vadd.f32 %v833, %v576
      %v1090 = vadd.f32 %v834, %v577
      %v1091 = vadd.f32 %v835, %v578
      %v1092 = vadd.f32 %v836, %v579
      %v1093 = vadd.f32 %v837, %v580
      %v1094 = vadd.f32 %v838, %v581
      %v1095 = vadd.f32 %v839, %v582
      %v1096 = vadd.f32 %v840, %v583
      %v1097 = vadd.f32 %v841, %v584
      %v1098 = vadd.f32 %v842, %v585
      %v1099 = vadd.f32 %v843, %v586
      %v1100 = vadd.f32 %v844, %v587
      %v1101 = vadd.f32 %v845, %v588
      %v1102 = vadd.f32 %v846, %v589
      %v1103 = vadd.f32 %v847, %v590
      %v1104 = vadd.f32 %v848, %v591
      %v1105 = vadd.f32 %v849, %v592
      %v1106 = vadd.f32 %v850, %v593
      %v1107 = vadd.f32 %v851, %v594
      %v1108 = vadd.f32 %v852, %v595
      %v1109 = vadd.f32 %v853, %v596
      %v1110 = vadd.f32 %v854, %v597
      %v1111 = vadd.f32 %v855, %v598
      %v1112 = vadd.f32 %v856, %v599
      %v1113 = vadd.f32 %v857, %v600
      %v1114 = vadd.f32 %v858, %v601
      %v1115 = vadd.f32 %v859, %v602
      %v1116 = vadd.f32 %v860, %v603
      %v1117 = vadd.f32 %v861, %v604
      %v1118 = vadd.f32 %v862, %v605
      %v1119 = vadd.f32 %v863, %v606
      %v1120 = vadd.f32 %v864, %v607
      %v1121 = vadd.f32 %v865, %v608
      %v1122 = vadd.f32 %v866, %v609
      %v1123 = vadd.f32 %v867, %v610
      %v1124 = vadd.f32 %v868, %v611
      %v1125 = vadd.f32 %v869, %v612
      %v1126 = vadd.f32 %v870, %v613
      %v1127 = vadd.f32 %v871, %v614
      %v1128 = vadd.f32 %v872, %v615
      %v1129 = vadd.f32 %v873, %v616
      %v1130 = vadd.f32 %v874, %v617
      %v1131 = vadd.f32 %v875, %v618
      %v1132 = vadd.f32 %v876, %v619
      %v1133 = vadd.f32 %v877, %v620
      %v1134 = vadd.f32 %v878, %v621
      %v1135 = vadd.f32 %v879, %v622
      %v1136 = vadd.f32 %v880, %v623
      %v1137 = vadd.f32 %v881, %v624
      %v1138 = vadd.f32 %v882, %v625
      %v1139 = vadd.f32 %v883, %v626
      %v1140 = vadd.f32 %v884, %v627
      %v1141 = vadd.f32 %v885, %v628
      %v1142 = vadd.f32 %v886, %v629
      %v1143 = vadd.f32 %v887, %v630
      %v1144 = vadd.f32 %v888, %v631
      %v1145 = vadd.f32 %v889, %v632
      %v1146 = vadd.f32 %v890, %v633
      %v1147 = vadd.f32 %v891, %v634
      %v1148 = vadd.f32 %v892, %v635
      %v1149 = vadd.f32 %v893, %v636
      %v1150 = vadd.f32 %v894, %v637
      %v1151 = vadd.f32 %v895, %v638
      %v1152 = vadd.f32 %v896, %v639
      %v1153 = vadd.f32 %v897, %v640
      %v1154 = vadd.f32 %v898, %v641
      %v1155 = vadd.f32 %v899, %v642
      %v1156 = vadd.f32 %v900, %v643
      %v1157 = vadd.f32 %v901, %v644
      %v1158 = vadd.f32 %v902, %v645
      %v1159 = vadd.f32 %v903, %v646
      %v1160 = vadd.f32 %v904, %v647
      %v1161 = vadd.f32 %v905, %v648
      %v1162 = vadd.f32 %v906, %v649
      %v1163 = vadd.f32 %v907, %v650
      %v1164 = vadd.f32 %v908, %v651
      %v1165 = vadd.f32 %v909, %v652
      %v1166 = vadd.f32 %v910, %v653
      %v1167 = vadd.f32 %v911, %v654
      %v1168 = vadd.f32 %v912, %v655
      %v1169 = vadd.f32 %v913, %v656
      %v1170 = vadd.f32 %v914, %v657
      %v1171 = vadd.f32 %v915, %v658
      %v1172 = vadd.f32 %v916, %v659
      %v1173 = vadd.f32 %v917, %v660
      %v1174 = vadd.f32 %v918, %v661
      %v1175 = vadd.f32 %v919, %v662
      %v1176 = vadd.f32 %v920, %v663
      %v1177 = vadd.f32 %v921, %v664
      %v1178 = vadd.f32 %v922, %v665
      %v1179 = vadd.f32 %v923, %v666
      %v1180 = vadd.f32 %v924, %v667
      %v1181 = vadd.f32 %v925, %v668
      %v1182 = vadd.f32 %v926, %v669
      %v1183 = vadd.f32 %v927, %v670
      %v1184 = vadd.f32 %v928, %v671
      %v1185 = vadd.f32 %v929, %v672
      %v1186 = vadd.f32 %v930, %v673
      %v1187 = vadd.f32 %v931, %v674
      %v1188 = vadd.f32 %v932, %v675
      %v1189 = vadd.f32 %v933, %v676
      %v1190 = vadd.f32 %v934, %v677
      %v1191 = vadd.f32 %v935, %v678
      %v1192 = vadd.f32 %v936, %v679
      %v1193 = vadd.f32 %v937, %v680
      %v1194 = vadd.f32 %v938, %v681
      %v1195 = vadd.f32 %v939, %v682
      %v1196 = vadd.f32 %v940, %v683
      %v1197 = vadd.f32 %v941, %v684
      %v1198 = vadd.f32 %v942, %v685
      %v1199 = vadd.f32 %v943, %v686
      %v1200 = vadd.f32 %v944, %v687
      %v1201 = vadd.f32 %v945, %v688
      %v1202 = vadd.f32 %v946, %v689
      %v1203 = vadd.f32 %v947, %v690
      %v1204 = vadd.f32 %v948, %v691
      %v1205 = vadd.f32 %v949, %v692
      %v1206 = vadd.f32 %v950, %v693
      %v1207 = vadd.f32 %v951, %v694
      %v1208 = vadd.f32 %v952, %v695
      %v1209 = vadd.f32 %v953, %v696
      %v1210 = vadd.f32 %v954, %v697
      %v1211 = vadd.f32 %v955, %v698
      %v1212 = vadd.f32 %v956, %v699
      %v1213 = vadd.f32 %v957, %v700
      %v1214 = vadd.f32 %v958, %v701
      %v1215 = vadd.f32 %v959, %v702
      %v1216 = vadd.f32 %v960, %v703
      %v1217 = vadd.f32 %v961, %v704
      %v1218 = vadd.f32 %v962, %v705
      %v1219 = vadd.f32 %v963, %v706
      %v1220 = vadd.f32 %v964, %v707
      %v1221 = vadd.f32 %v965, %v708
      %v1222 = vadd.f32 %v966, %v709
      %v1223 = vadd.f32 %v967, %v710
      %v1224 = vadd.f32 %v968, %v711
      %v1225 = vadd.f32 %v969, %v712
      %v1226 = vadd.f32 %v970, %v713
      %v1227 = vadd.f32 %v971, %v714
      %v1228 = vadd.f32 %v972, %v715
      %v1229 = vadd.f32 %v973, %v716
      %v1230 = vadd.f32 %v974, %v717
      %v1231 = vmul.f32 %v975, 0.5
      %v1232 = vmul.f32 %v976, 0.5
      %v1233 = vmul.f32 %v977, 0.5
      %v1234 = vmul.f32 %v978, 0.5
      %v1235 = vmul.f32 %v979, 0.5
      %v1236 = vmul.f32 %v980, 0.5
      %v1237 = vmul.f32 %v981, 0.5
      %v1238 = vmul.f32 %v982, 0.5
      %v1239 = vmul.f32 %v983, 0.5
      %v1240 = vmul.f32 %v984, 0.5
      %v1241 = vmul.f32 %v985, 0.5
      %v1242 = vmul.f32 %v986, 0.5
      %v1243 = vmul.f32 %v987, 0.5
      %v1244 = vmul.f32 %v988, 0.5
      %v1245 = vmul.f32 %v989, 0.5
      %v1246 = vmul.f32 %v990, 0.5
      %v1247 = vmul.f32 %v991, 0.5
      %v1248 = vmul.f32 %v992, 0.5
      %v1249 = vmul.f32 %v993, 0.5
      %v1250 = vmul.f32 %v994, 0.5
      %v1251 = vmul.f32 %v995, 0.5
      %v1252 = vmul.f32 %v996, 0.5
      %v1253 = vmul.f32 %v997, 0.5
      %v1254 = vmul.f32 %v998, 0.5
      %v1255 = vmul.f32 %v999, 0.5
      %v1256 = vmul.f32 %v1000, 0.5
      %v1257 = vmul.f32 %v1001, 0.5
      %v1258 = vmul.f32 %v1002, 0.5
      %v1259 = vmul.f32 %v1003, 0.5
      %v1260 = vmul.f32 %v1004, 0.5
      %v1261 = vmul.f32 %v1005, 0.5
      %v1262 = vmul.f32 %v1006, 0.5
      %v1263 = vmul.f32 %v1007, 0.5
      %v1264 = vmul.f32 %v1008, 0.5
      %v1265 = vmul.f32 %v1009, 0.5
      %v1266 = vmul.f32 %v1010, 0.5
      %v1267 = vmul.f32 %v1011, 0.5
      %v1268 = vmul.f32 %v1012, 0.5
      %v1269 = vmul.f32 %v1013, 0.5
      %v1270 = vmul.f32 %v1014, 0.5
      %v1271 = vmul.f32 %v1015, 0.5
      %v1272 = vmul.f32 %v1016, 0.5
      %v1273 = vmul.f32 %v1017, 0.5
      %v1274 = vmul.f32 %v1018, 0.5
      %v1275 = vmul.f32 %v1019, 0.5
      %v1276 = vmul.f32 %v1020, 0.5
      %v1277 = vmul.f32 %v1021, 0.5
      %v1278 = vmul.f32 %v1022, 0.5
      %v1279 = vmul.f32 %v1023, 0.5
      %v1280 = vmul.f32 %v1024, 0.5
      %v1281 = vmul.f32 %v1025, 0.5
      %v1282 = vmul.f32 %v1026, 0.5
      %v1283 = vmul.f32 %v1027, 0.5
      %v1284 = vmul.f32 %v1028, 0.5
      %v1285 = vmul.f32 %v1029, 0.5
      %v1286 = vmul.f32 %v1030, 0.5
      %v1287 = vmul.f32 %v1031, 0.5
      %v1288 = vmul.f32 %v1032, 0.5
      %v1289 = vmul.f32 %v1033, 0.5
      %v1290 = vmul.f32 %v1034, 0.5
      %v1291 = vmul.f32 %v1035, 0.5
      %v1292 = vmul.f32 %v1036, 0.5
      %v1293 = vmul.f32 %v1037, 0.5
      %v1294 = vmul.f32 %v1038, 0.5
      %v1295 = vmul.f32 %v1039, 0.5
      %v1296 = vmul.f32 %v1040, 0.5
      %v1297 = vmul.f32 %v1041, 0.5
      %v1298 = vmul.f32 %v1042, 0.5
      %v1299 = vmul.f32 %v1043, 0.5
      %v1300 = vmul.f32 %v1044, 0.5
      %v1301 = vmul.f32 %v1045, 0.5
      %v1302 = vmul.f32 %v1046, 0.5
      %v1303 = vmul.f32 %v1047, 0.5
      %v1304 = vmul.f32 %v1048, 0.5
      %v1305 = vmul.f32 %v1049, 0.5
      %v1306 = vmul.f32 %v1050, 0.5
      %v1307 = vmul.f32 %v1051, 0.5
      %v1308 = vmul.f32 %v1052, 0.5
      %v1309 = vmul.f32 %v1053, 0.5
      %v1310 = vmul.f32 %v1054, 0.5
      %v1311 = vmul.f32 %v1055, 0.5
      %v1312 = vmul.f32 %v1056, 0.5
      %v1313 = vmul.f32 %v1057, 0.5
      %v1314 = vmul.f32 %v1058, 0.5
      %v1315 = vmul.f32 %v1059, 0.5
      %v1316 = vmul.f32 %v1060, 0.5
      %v1317 = vmul.f32 %v1061, 0.5
      %v1318 = vmul.f32 %v1062, 0.5
      %v1319 = vmul.f32 %v1063, 0.5
      %v1320 = vmul.f32 %v1064, 0.5
      %v1321 = vmul.f32 %v1065, 0.5
      %v1322 = vmul.f32 %v1066, 0.5
      %v1323 = vmul.f32 %v1067, 0.5
      %v1324 = vmul.f32 %v1068, 0.5
      %v1325 = vmul.f32 %v1069, 0.5
      %v1326 = vmul.f32 %v1070, 0.5
      %v1327 = vmul.f32 %v1071, 0.5
      %v1328 = vmul.f32 %v1072, 0.5
      %v1329 = vmul.f32 %v1073, 0.5
      %v1330 = vmul.f32 %v1074, 0.5
      %v1331 = vmul.f32 %v1075, 0.5
      %v1332 = vmul.f32 %v1076, 0.5
      %v1333 = vmul.f32 %v1077, 0.5
      %v1334 = vmul.f32 %v1078, 0.5
      %v1335 = vmul.f32 %v1079, 0.5
      %v1336 = vmul.f32 %v1080, 0.5
      %v1337 = vmul.f32 %v1081, 0.5
      %v1338 = vmul.f32 %v1082, 0.5
      %v1339 = vmul.f32 %v1083, 0.5
      %v1340 = vmul.f32 %v1084, 0.5
      %v1341 = vmul.f32 %v1085, 0.5
      %v1342 = vmul.f32 %v1086, 0.5
      %v1343 = vmul.f32 %v1087, 0.5
      %v1344 = vmul.f32 %v1088, 0.5
      %v1345 = vmul.f32 %v1089, 0.5
      %v1346 = vmul.f32 %v1090, 0.5
      %v1347 = vmul.f32 %v1091, 0.5
      %v1348 = vmul.f32 %v1092, 0.5
      %v1349 = vmul.f32 %v1093, 0.5
      %v1350 = vmul.f32 %v1094, 0.5
      %v1351 = vmul.f32 %v1095, 0.5
      %v1352 = vmul.f32 %v1096, 0.5
      %v1353 = vmul.f32 %v1097, 0.5
      %v1354 = vmul.f32 %v1098, 0.5
      %v1355 = vmul.f32 %v1099, 0.5
      %v1356 = vmul.f32 %v1100, 0.5
      %v1357 = vmul.f32 %v1101, 0.5
      %v1358 = vmul.f32 %v1102, 0.5
      %v1359 = vmul.f32 %v1103, 0.5
      %v1360 = vmul.f32 %v1104, 0.5
      %v1361 = vmul.f32 %v1105, 0.5
      %v1362 = vmul.f32 %v1106, 0.5
      %v1363 = vmul.f32 %v1107, 0.5
      %v1364 = vmul.f32 %v1108, 0.5
      %v1365 = vmul.f32 %v1109, 0.5
      %v1366 = vmul.f32 %v1110, 0.5
      %v1367 = vmul.f32 %v1111, 0.5
      %v1368 = vmul.f32 %v1112, 0.5
      %v1369 = vmul.f32 %v1113, 0.5
      %v1370 = vmul.f32 %v1114, 0.5
      %v1371 = vmul.f32 %v1115, 0.5
      %v1372 = vmul.f32 %v1116, 0.5
      %v1373 = vmul.f32 %v1117, 0.5
      %v1374 = vmul.f32 %v1118, 0.5
      %v1375 = vmul.f32 %v1119, 0.5
      %v1376 = vmul.f32 %v1120, 0.5
      %v1377 = vmul.f32 %v1121, 0.5
      %v1378 = vmul.f32 %v1122, 0.5
      %v1379 = vmul.f32 %v1123, 0.5
      %v1380 = vmul.f32 %v1124, 0.5
      %v1381 = vmul.f32 %v1125, 0.5
      %v1382 = vmul.f32 %v1126, 0.5
      %v1383 = vmul.f32 %v1127, 0.5
      %v1384 = vmul.f32 %v1128, 0.5
      %v1385 = vmul.f32 %v1129, 0.5
      %v1386 = vmul.f32 %v1130, 0.5
      %v1387 = vmul.f32 %v1131, 0.5
      %v1388 = vmul.f32 %v1132, 0.5
      %v1389 = vmul.f32 %v1133, 0.5
      %v1390 = vmul.f32 %v1134, 0.5
      %v1391 = vmul.f32 %v1135, 0.5
      %v1392 = vmul.f32 %v1136, 0.5
      %v1393 = vmul.f32 %v1137, 0.5
      %v1394 = vmul.f32 %v1138, 0.5
      %v1395 = vmul.f32 %v1139, 0.5
      %v1396 = vmul.f32 %v1140, 0.5
      %v1397 = vmul.f32 %v1141, 0.5
      %v1398 = vmul.f32 %v1142, 0.5
      %v1399 = vmul.f32 %v1143, 0.5
      %v1400 = vmul.f32 %v1144, 0.5
      %v1401 = vmul.f32 %v1145, 0.5
      %v1402 = vmul.f32 %v1146, 0.5
      %v1403 = vmul.f32 %v1147, 0.5
      %v1404 = vmul.f32 %v1148, 0.5
      %v1405 = vmul.f32 %v1149, 0.5
      %v1406 = vmul.f32 %v1150, 0.5
      %v1407 = vmul.f32 %v1151, 0.5
      %v1408 = vmul.f32 %v1152, 0.5
      %v1409 = vmul.f32 %v1153, 0.5
      %v1410 = vmul.f32 %v1154, 0.5
      %v1411 = vmul.f32 %v1155, 0.5
      %v1412 = vmul.f32 %v1156, 0.5
      %v1413 = vmul.f32 %v1157, 0.5
      %v1414 = vmul.f32 %v1158, 0.5
      %v1415 = vmul.f32 %v1159, 0.5
      %v1416 = vmul.f32 %v1160, 0.5
      %v1417 = vmul.f32 %v1161, 0.5
      %v1418 = vmul.f32 %v1162, 0.5
      %v1419 = vmul.f32 %v1163, 0.5
      %v1420 = vmul.f32 %v1164, 0.5
      %v1421 = vmul.f32 %v1165, 0.5
      %v1422 = vmul.f32 %v1166, 0.5
      %v1423 = vmul.f32 %v1167, 0.5
      %v1424 = vmul.f32 %v1168, 0.5
      %v1425 = vmul.f32 %v1169, 0.5
      %v1426 = vmul.f32 %v1170, 0.5
      %v1427 = vmul.f32 %v1171, 0.5
      %v1428 = vmul.f32 %v1172, 0.5
      %v1429 = vmul.f32 %v1173, 0.5
      %v1430 = vmul.f32 %v1174, 0.5
      %v1431 = vmul.f32 %v1175, 0.5
      %v1432 = vmul.f32 %v1176, 0.5
      %v1433 = vmul.f32 %v1177, 0.5
      %v1434 = vmul.f32 %v1178, 0.5
      %v1435 = vmul.f32 %v1179, 0.5
      %v1436 = vmul.f32 %v1180, 0.5
      %v1437 = vmul.f32 %v1181, 0.5
      %v1438 = vmul.f32 %v1182, 0.5
      %v1439 = vmul.f32 %v1183, 0.5
      %v1440 = vmul.f32 %v1184, 0.5
      %v1441 = vmul.f32 %v1185, 0.5
      %v1442 = vmul.f32 %v1186, 0.5
      %v1443 = vmul.f32 %v1187, 0.5
      %v1444 = vmul.f32 %v1188, 0.5
      %v1445 = vmul.f32 %v1189, 0.5
      %v1446 = vmul.f32 %v1190, 0.5
      %v1447 = vmul.f32 %v1191, 0.5
      %v1448 = vmul.f32 %v1192, 0.5
      %v1449 = vmul.f32 %v1193, 0.5
      %v1450 = vmul.f32 %v1194, 0.5
      %v1451 = vmul.f32 %v1195, 0.5
      %v1452 = vmul.f32 %v1196, 0.5
      %v1453 = vmul.f32 %v1197, 0.5
      %v1454 = vmul.f32 %v1198, 0.5
      %v1455 = vmul.f32 %v1199, 0.5
      %v1456 = vmul.f32 %v1200, 0.5
      %v1457 = vmul.f32 %v1201, 0.5
      %v1458 = vmul.f32 %v1202, 0.5
      %v1459 = vmul.f32 %v1203, 0.5
      %v1460 = vmul.f32 %v1204, 0.5
      %v1461 = vmul.f32 %v1205, 0.5
      %v1462 = vmul.f32 %v1206, 0.5
      %v1463 = vmul.f32 %v1207, 0.5
      %v1464 = vmul.f32 %v1208, 0.5
      %v1465 = vmul.f32 %v1209, 0.5
      %v1466 = vmul.f32 %v1210, 0.5
      %v1467 = vmul.f32 %v1211, 0.5
      %v1468 = vmul.f32 %v1212, 0.5
      %v1469 = vmul.f32 %v1213, 0.5
      %v1470 = vmul.f32 %v1214, 0.5
      %v1471 = vmul.f32 %v1215, 0.5
      %v1472 = vmul.f32 %v1216, 0.5
      %v1473 = vmul.f32 %v1217, 0.5
      %v1474 = vmul.f32 %v1218, 0.5
      %v1475 = vmul.f32 %v1219, 0.5
      %v1476 = vmul.f32 %v1220, 0.5
      %v1477 = vmul.f32 %v1221, 0.5
      %v1478 = vmul.f32 %v1222, 0.5
      %v1479 = vmul.f32 %v1223, 0.5
      %v1480 = vmul.f32 %v1224, 0.5
      %v1481 = vmul.f32 %v1225, 0.5
      %v1482 = vmul.f32 %v1226, 0.5
      %v1483 = vmul.f32 %v1227, 0.5
      %v1484 = vmul.f32 %v1228, 0.5
      %v1485 = vmul.f32 %v1229, 0.5
      %v1486 = vmul.f32 %v1230, 0.5
      %1487 = vst [vmem:[%s203] sm:$0xff] %v1231
      %1488 = vst [vmem:[%s203 + $0x8] sm:$0xff] %v1232
      %1489 = vst [vmem:[%s203 + $0x10] sm:$0xff] %v1233
      %1490 = vst [vmem:[%s203 + $0x18] sm:$0xff] %v1234
      %1491 = vst [vmem:[%s203 + $0x20] sm:$0xff] %v1235
      %1492 = vst [vmem:[%s203 + $0x28] sm:$0xff] %v1236
      %1493 = vst [vmem:[%s203 + $0x30] sm:$0xff] %v1237
      %1494 = vst [vmem:[%s203 + $0x38] sm:$0xff] %v1238
      %1495 = vst [vmem:[%s203 + $0x40] sm:$0xff] %v1239
      %1496 = vst [vmem:[%s203 + $0x48] sm:$0xff] %v1240
      %1497 = vst [vmem:[%s203 + $0x50] sm:$0xff] %v1241
      %1498 = vst [vmem:[%s203 + $0x58] sm:$0xff] %v1242
      %1499 = vst [vmem:[%s203 + $0x60] sm:$0xff] %v1243
      %1500 = vst [vmem:[%s203 + $0x68] sm:$0xff] %v1244
      %1501 = vst [vmem:[%s203 + $0x70] sm:$0xff] %v1245
      %1502 = vst [vmem:[%s203 + $0x78] sm:$0xff] %v1246
      %1503 = vst [vmem:[%s203 + $0x80] sm:$0xff] %v1247
      %1504 = vst [vmem:[%s203 + $0x88] sm:$0xff] %v1248
      %1505 = vst [vmem:[%s203 + $0x90] sm:$0xff] %v1249
      %1506 = vst [vmem:[%s203 + $0x98] sm:$0xff] %v1250
      %1507 = vst [vmem:[%s203 + $0xa0] sm:$0xff] %v1251
      %1508 = vst [vmem:[%s203 + $0xa8] sm:$0xff] %v1252
      %1509 = vst [vmem:[%s203 + $0xb0] sm:$0xff] %v1253
      %1510 = vst [vmem:[%s203 + $0xb8] sm:$0xff] %v1254
      %1511 = vst [vmem:[%s203 + $0xc0] sm:$0xff] %v1255
      %1512 = vst [vmem:[%s203 + $0xc8] sm:$0xff] %v1256
      %1513 = vst [vmem:[%s203 + $0xd0] sm:$0xff] %v1257
      %1514 = vst [vmem:[%s203 + $0xd8] sm:$0xff] %v1258
      %1515 = vst [vmem:[%s203 + $0xe0] sm:$0xff] %v1259
      %1516 = vst [vmem:[%s203 + $0xe8] sm:$0xff] %v1260
      %1517 = vst [vmem:[%s203 + $0xf0] sm:$0xff] %v1261
      %1518 = vst [vmem:[%s203 + $0xf8] sm:$0xff] %v1262
      %1519 = vst [vmem:[%s203 + $0x100] sm:$0xff] %v1263
      %1520 = vst [vmem:[%s203 + $0x108] sm:$0xff] %v1264
      %1521 = vst [vmem:[%s203 + $0x110] sm:$0xff] %v1265
      %1522 = vst [vmem:[%s203 + $0x118] sm:$0xff] %v1266
      %1523 = vst [vmem:[%s203 + $0x120] sm:$0xff] %v1267
      %1524 = vst [vmem:[%s203 + $0x128] sm:$0xff] %v1268
      %1525 = vst [vmem:[%s203 + $0x130] sm:$0xff] %v1269
      %1526 = vst [vmem:[%s203 + $0x138] sm:$0xff] %v1270
      %1527 = vst [vmem:[%s203 + $0x140] sm:$0xff] %v1271
      %1528 = vst [vmem:[%s203 + $0x148] sm:$0xff] %v1272
      %1529 = vst [vmem:[%s203 + $0x150] sm:$0xff] %v1273
      %1530 = vst [vmem:[%s203 + $0x158] sm:$0xff] %v1274
      %1531 = vst [vmem:[%s203 + $0x160] sm:$0xff] %v1275
      %1532 = vst [vmem:[%s203 + $0x168] sm:$0xff] %v1276
      %1533 = vst [vmem:[%s203 + $0x170] sm:$0xff] %v1277
      %1534 = vst [vmem:[%s203 + $0x178] sm:$0xff] %v1278
      %1535 = vst [vmem:[%s203 + $0x180] sm:$0xff] %v1279
      %1536 = vst [vmem:[%s203 + $0x188] sm:$0xff] %v1280
      %1537 = vst [vmem:[%s203 + $0x190] sm:$0xff] %v1281
      %1538 = vst [vmem:[%s203 + $0x198] sm:$0xff] %v1282
      %1539 = vst [vmem:[%s203 + $0x1a0] sm:$0xff] %v1283
      %1540 = vst [vmem:[%s203 + $0x1a8] sm:$0xff] %v1284
      %1541 = vst [vmem:[%s203 + $0x1b0] sm:$0xff] %v1285
      %1542 = vst [vmem:[%s203 + $0x1b8] sm:$0xff] %v1286
      %1543 = vst [vmem:[%s203 + $0x1c0] sm:$0xff] %v1287
      %1544 = vst [vmem:[%s203 + $0x1c8] sm:$0xff] %v1288
      %1545 = vst [vmem:[%s203 + $0x1d0] sm:$0xff] %v1289
      %1546 = vst [vmem:[%s203 + $0x1d8] sm:$0xff] %v1290
      %1547 = vst [vmem:[%s203 + $0x1e0] sm:$0xff] %v1291
      %1548 = vst [vmem:[%s203 + $0x1e8] sm:$0xff] %v1292
      %1549 = vst [vmem:[%s203 + $0x1f0] sm:$0xff] %v1293
      %1550 = vst [vmem:[%s203 + $0x1f8] sm:$0xff] %v1294
      %1551 = vst [vmem:[%s203 + $0x200] sm:$0xff] %v1295
      %1552 = vst [vmem:[%s203 + $0x208] sm:$0xff] %v1296
      %1553 = vst [vmem:[%s203 + $0x210] sm:$0xff] %v1297
      %1554 = vst [vmem:[%s203 + $0x218] sm:$0xff] %v1298
      %1555 = vst [vmem:[%s203 + $0x220] sm:$0xff] %v1299
      %1556 = vst [vmem:[%s203 + $0x228] sm:$0xff] %v1300
      %1557 = vst [vmem:[%s203 + $0x230] sm:$0xff] %v1301
      %1558 = vst [vmem:[%s203 + $0x238] sm:$0xff] %v1302
      %1559 = vst [vmem:[%s203 + $0x240] sm:$0xff] %v1303
      %1560 = vst [vmem:[%s203 + $0x248] sm:$0xff] %v1304
      %1561 = vst [vmem:[%s203 + $0x250] sm:$0xff] %v1305
      %1562 = vst [vmem:[%s203 + $0x258] sm:$0xff] %v1306
      %1563 = vst [vmem:[%s203 + $0x260] sm:$0xff] %v1307
      %1564 = vst [vmem:[%s203 + $0x268] sm:$0xff] %v1308
      %1565 = vst [vmem:[%s203 + $0x270] sm:$0xff] %v1309
      %1566 = vst [vmem:[%s203 + $0x278] sm:$0xff] %v1310
      %1567 = vst [vmem:[%s203 + $0x280] sm:$0xff] %v1311
      %1568 = vst [vmem:[%s203 + $0x288] sm:$0xff] %v1312
      %1569 = vst [vmem:[%s203 + $0x290] sm:$0xff] %v1313
      %1570 = vst [vmem:[%s203 + $0x298] sm:$0xff] %v1314
      %1571 = vst [vmem:[%s203 + $0x2a0] sm:$0xff] %v1315
      %1572 = vst [vmem:[%s203 + $0x2a8] sm:$0xff] %v1316
      %1573 = vst [vmem:[%s203 + $0x2b0] sm:$0xff] %v1317
      %1574 = vst [vmem:[%s203 + $0x2b8] sm:$0xff] %v1318
      %1575 = vst [vmem:[%s203 + $0x2c0] sm:$0xff] %v1319
      %1576 = vst [vmem:[%s203 + $0x2c8] sm:$0xff] %v1320
      %1577 = vst [vmem:[%s203 + $0x2d0] sm:$0xff] %v1321
      %1578 = vst [vmem:[%s203 + $0x2d8] sm:$0xff] %v1322
      %1579 = vst [vmem:[%s203 + $0x2e0] sm:$0xff] %v1323
      %1580 = vst [vmem:[%s203 + $0x2e8] sm:$0xff] %v1324
      %1581 = vst [vmem:[%s203 + $0x2f0] sm:$0xff] %v1325
      %1582 = vst [vmem:[%s203 + $0x2f8] sm:$0xff] %v1326
      %1583 = vst [vmem:[%s203 + $0x300] sm:$0xff] %v1327
      %1584 = vst [vmem:[%s203 + $0x308] sm:$0xff] %v1328
      %1585 = vst [vmem:[%s203 + $0x310] sm:$0xff] %v1329
      %1586 = vst [vmem:[%s203 + $0x318] sm:$0xff] %v1330
      %1587 = vst [vmem:[%s203 + $0x320] sm:$0xff] %v1331
      %1588 = vst [vmem:[%s203 + $0x328] sm:$0xff] %v1332
      %1589 = vst [vmem:[%s203 + $0x330] sm:$0xff] %v1333
      %1590 = vst [vmem:[%s203 + $0x338] sm:$0xff] %v1334
      %1591 = vst [vmem:[%s203 + $0x340] sm:$0xff] %v1335
      %1592 = vst [vmem:[%s203 + $0x348] sm:$0xff] %v1336
      %1593 = vst [vmem:[%s203 + $0x350] sm:$0xff] %v1337
      %1594 = vst [vmem:[%s203 + $0x358] sm:$0xff] %v1338
      %1595 = vst [vmem:[%s203 + $0x360] sm:$0xff] %v1339
      %1596 = vst [vmem:[%s203 + $0x368] sm:$0xff] %v1340
      %1597 = vst [vmem:[%s203 + $0x370] sm:$0xff] %v1341
      %1598 = vst [vmem:[%s203 + $0x378] sm:$0xff] %v1342
      %1599 = vst [vmem:[%s203 + $0x380] sm:$0xff] %v1343
      %1600 = vst [vmem:[%s203 + $0x388] sm:$0xff] %v1344
      %1601 = vst [vmem:[%s203 + $0x390] sm:$0xff] %v1345
      %1602 = vst [vmem:[%s203 + $0x398] sm:$0xff] %v1346
      %1603 = vst [vmem:[%s203 + $0x3a0] sm:$0xff] %v1347
      %1604 = vst [vmem:[%s203 + $0x3a8] sm:$0xff] %v1348
      %1605 = vst [vmem:[%s203 + $0x3b0] sm:$0xff] %v1349
      %1606 = vst [vmem:[%s203 + $0x3b8] sm:$0xff] %v1350
      %1607 = vst [vmem:[%s203 + $0x3c0] sm:$0xff] %v1351
      %1608 = vst [vmem:[%s203 + $0x3c8] sm:$0xff] %v1352
      %1609 = vst [vmem:[%s203 + $0x3d0] sm:$0xff] %v1353
      %1610 = vst [vmem:[%s203 + $0x3d8] sm:$0xff] %v1354
      %1611 = vst [vmem:[%s203 + $0x3e0] sm:$0xff] %v1355
      %1612 = vst [vmem:[%s203 + $0x3e8] sm:$0xff] %v1356
      %1613 = vst [vmem:[%s203 + $0x3f0] sm:$0xff] %v1357
      %1614 = vst [vmem:[%s203 + $0x3f8] sm:$0xff] %v1358
      %1615 = vst [vmem:[%s203 + $0x400] sm:$0xff] %v1359
      %1616 = vst [vmem:[%s203 + $0x408] sm:$0xff] %v1360
      %1617 = vst [vmem:[%s203 + $0x410] sm:$0xff] %v1361
      %1618 = vst [vmem:[%s203 + $0x418] sm:$0xff] %v1362
      %1619 = vst [vmem:[%s203 + $0x420] sm:$0xff] %v1363
      %1620 = vst [vmem:[%s203 + $0x428] sm:$0xff] %v1364
      %1621 = vst [vmem:[%s203 + $0x430] sm:$0xff] %v1365
      %1622 = vst [vmem:[%s203 + $0x438] sm:$0xff] %v1366
      %1623 = vst [vmem:[%s203 + $0x440] sm:$0xff] %v1367
      %1624 = vst [vmem:[%s203 + $0x448] sm:$0xff] %v1368
      %1625 = vst [vmem:[%s203 + $0x450] sm:$0xff] %v1369
      %1626 = vst [vmem:[%s203 + $0x458] sm:$0xff] %v1370
      %1627 = vst [vmem:[%s203 + $0x460] sm:$0xff] %v1371
      %1628 = vst [vmem:[%s203 + $0x468] sm:$0xff] %v1372
      %1629 = vst [vmem:[%s203 + $0x470] sm:$0xff] %v1373
      %1630 = vst [vmem:[%s203 + $0x478] sm:$0xff] %v1374
      %1631 = vst [vmem:[%s203 + $0x480] sm:$0xff] %v1375
      %1632 = vst [vmem:[%s203 + $0x488] sm:$0xff] %v1376
      %1633 = vst [vmem:[%s203 + $0x490] sm:$0xff] %v1377
      %1634 = vst [vmem:[%s203 + $0x498] sm:$0xff] %v1378
      %1635 = vst [vmem:[%s203 + $0x4a0] sm:$0xff] %v1379
      %1636 = vst [vmem:[%s203 + $0x4a8] sm:$0xff] %v1380
      %1637 = vst [vmem:[%s203 + $0x4b0] sm:$0xff] %v1381
      %1638 = vst [vmem:[%s203 + $0x4b8] sm:$0xff] %v1382
      %1639 = vst [vmem:[%s203 + $0x4c0] sm:$0xff] %v1383
      %1640 = vst [vmem:[%s203 + $0x4c8] sm:$0xff] %v1384
      %1641 = vst [vmem:[%s203 + $0x4d0] sm:$0xff] %v1385
      %1642 = vst [vmem:[%s203 + $0x4d8] sm:$0xff] %v1386
      %1643 = vst [vmem:[%s203 + $0x4e0] sm:$0xff] %v1387
      %1644 = vst [vmem:[%s203 + $0x4e8] sm:$0xff] %v1388
      %1645 = vst [vmem:[%s203 + $0x4f0] sm:$0xff] %v1389
      %1646 = vst [vmem:[%s203 + $0x4f8] sm:$0xff] %v1390
      %1647 = vst [vmem:[%s203 + $0x500] sm:$0xff] %v1391
      %1648 = vst [vmem:[%s203 + $0x508] sm:$0xff] %v1392
      %1649 = vst [vmem:[%s203 + $0x510] sm:$0xff] %v1393
      %1650 = vst [vmem:[%s203 + $0x518] sm:$0xff] %v1394
      %1651 = vst [vmem:[%s203 + $0x520] sm:$0xff] %v1395
      %1652 = vst [vmem:[%s203 + $0x528] sm:$0xff] %v1396
      %1653 = vst [vmem:[%s203 + $0x530] sm:$0xff] %v1397
      %1654 = vst [vmem:[%s203 + $0x538] sm:$0xff] %v1398
      %1655 = vst [vmem:[%s203 + $0x540] sm:$0xff] %v1399
      %1656 = vst [vmem:[%s203 + $0x548] sm:$0xff] %v1400
      %1657 = vst [vmem:[%s203 + $0x550] sm:$0xff] %v1401
      %1658 = vst [vmem:[%s203 + $0x558] sm:$0xff] %v1402
      %1659 = vst [vmem:[%s203 + $0x560] sm:$0xff] %v1403
      %1660 = vst [vmem:[%s203 + $0x568] sm:$0xff] %v1404
      %1661 = vst [vmem:[%s203 + $0x570] sm:$0xff] %v1405
      %1662 = vst [vmem:[%s203 + $0x578] sm:$0xff] %v1406
      %1663 = vst [vmem:[%s203 + $0x580] sm:$0xff] %v1407
      %1664 = vst [vmem:[%s203 + $0x588] sm:$0xff] %v1408
      %1665 = vst [vmem:[%s203 + $0x590] sm:$0xff] %v1409
      %1666 = vst [vmem:[%s203 + $0x598] sm:$0xff] %v1410
      %1667 = vst [vmem:[%s203 + $0x5a0] sm:$0xff] %v1411
      %1668 = vst [vmem:[%s203 + $0x5a8] sm:$0xff] %v1412
      %1669 = vst [vmem:[%s203 + $0x5b0] sm:$0xff] %v1413
      %1670 = vst [vmem:[%s203 + $0x5b8] sm:$0xff] %v1414
      %1671 = vst [vmem:[%s203 + $0x5c0] sm:$0xff] %v1415
      %1672 = vst [vmem:[%s203 + $0x5c8] sm:$0xff] %v1416
      %1673 = vst [vmem:[%s203 + $0x5d0] sm:$0xff] %v1417
      %1674 = vst [vmem:[%s203 + $0x5d8] sm:$0xff] %v1418
      %1675 = vst [vmem:[%s203 + $0x5e0] sm:$0xff] %v1419
      %1676 = vst [vmem:[%s203 + $0x5e8] sm:$0xff] %v1420
      %1677 = vst [vmem:[%s203 + $0x5f0] sm:$0xff] %v1421
      %1678 = vst [vmem:[%s203 + $0x5f8] sm:$0xff] %v1422
      %1679 = vst [vmem:[%s203 + $0x600] sm:$0xff] %v1423
      %1680 = vst [vmem:[%s203 + $0x608] sm:$0xff] %v1424
      %1681 = vst [vmem:[%s203 + $0x610] sm:$0xff] %v1425
      %1682 = vst [vmem:[%s203 + $0x618] sm:$0xff] %v1426
      %1683 = vst [vmem:[%s203 + $0x620] sm:$0xff] %v1427
      %1684 = vst [vmem:[%s203 + $0x628] sm:$0xff] %v1428
      %1685 = vst [vmem:[%s203 + $0x630] sm:$0xff] %v1429
      %1686 = vst [vmem:[%s203 + $0x638] sm:$0xff] %v1430
      %1687 = vst [vmem:[%s203 + $0x640] sm:$0xff] %v1431
      %1688 = vst [vmem:[%s203 + $0x648] sm:$0xff] %v1432
      %1689 = vst [vmem:[%s203 + $0x650] sm:$0xff] %v1433
      %1690 = vst [vmem:[%s203 + $0x658] sm:$0xff] %v1434
      %1691 = vst [vmem:[%s203 + $0x660] sm:$0xff] %v1435
      %1692 = vst [vmem:[%s203 + $0x668] sm:$0xff] %v1436
      %1693 = vst [vmem:[%s203 + $0x670] sm:$0xff] %v1437
      %1694 = vst [vmem:[%s203 + $0x678] sm:$0xff] %v1438
      %1695 = vst [vmem:[%s203 + $0x680] sm:$0xff] %v1439
      %1696 = vst [vmem:[%s203 + $0x688] sm:$0xff] %v1440
      %1697 = vst [vmem:[%s203 + $0x690] sm:$0xff] %v1441
      %1698 = vst [vmem:[%s203 + $0x698] sm:$0xff] %v1442
      %1699 = vst [vmem:[%s203 + $0x6a0] sm:$0xff] %v1443
      %1700 = vst [vmem:[%s203 + $0x6a8] sm:$0xff] %v1444
      %1701 = vst [vmem:[%s203 + $0x6b0] sm:$0xff] %v1445
      %1702 = vst [vmem:[%s203 + $0x6b8] sm:$0xff] %v1446
      %1703 = vst [vmem:[%s203 + $0x6c0] sm:$0xff] %v1447
      %1704 = vst [vmem:[%s203 + $0x6c8] sm:$0xff] %v1448
      %1705 = vst [vmem:[%s203 + $0x6d0] sm:$0xff] %v1449
      %1706 = vst [vmem:[%s203 + $0x6d8] sm:$0xff] %v1450
      %1707 = vst [vmem:[%s203 + $0x6e0] sm:$0xff] %v1451
      %1708 = vst [vmem:[%s203 + $0x6e8] sm:$0xff] %v1452
      %1709 = vst [vmem:[%s203 + $0x6f0] sm:$0xff] %v1453
      %1710 = vst [vmem:[%s203 + $0x6f8] sm:$0xff] %v1454
      %1711 = vst [vmem:[%s203 + $0x700] sm:$0xff] %v1455
      %1712 = vst [vmem:[%s203 + $0x708] sm:$0xff] %v1456
      %1713 = vst [vmem:[%s203 + $0x710] sm:$0xff] %v1457
      %1714 = vst [vmem:[%s203 + $0x718] sm:$0xff] %v1458
      %1715 = vst [vmem:[%s203 + $0x720] sm:$0xff] %v1459
      %1716 = vst [vmem:[%s203 + $0x728] sm:$0xff] %v1460
      %1717 = vst [vmem:[%s203 + $0x730] sm:$0xff] %v1461
      %1718 = vst [vmem:[%s203 + $0x738] sm:$0xff] %v1462
      %1719 = vst [vmem:[%s203 + $0x740] sm:$0xff] %v1463
      %1720 = vst [vmem:[%s203 + $0x748] sm:$0xff] %v1464
      %1721 = vst [vmem:[%s203 + $0x750] sm:$0xff] %v1465
      %1722 = vst [vmem:[%s203 + $0x758] sm:$0xff] %v1466
      %1723 = vst [vmem:[%s203 + $0x760] sm:$0xff] %v1467
      %1724 = vst [vmem:[%s203 + $0x768] sm:$0xff] %v1468
      %1725 = vst [vmem:[%s203 + $0x770] sm:$0xff] %v1469
      %1726 = vst [vmem:[%s203 + $0x778] sm:$0xff] %v1470
      %1727 = vst [vmem:[%s203 + $0x780] sm:$0xff] %v1471
      %1728 = vst [vmem:[%s203 + $0x788] sm:$0xff] %v1472
      %1729 = vst [vmem:[%s203 + $0x790] sm:$0xff] %v1473
      %1730 = vst [vmem:[%s203 + $0x798] sm:$0xff] %v1474
      %1731 = vst [vmem:[%s203 + $0x7a0] sm:$0xff] %v1475
      %1732 = vst [vmem:[%s203 + $0x7a8] sm:$0xff] %v1476
      %1733 = vst [vmem:[%s203 + $0x7b0] sm:$0xff] %v1477
      %1734 = vst [vmem:[%s203 + $0x7b8] sm:$0xff] %v1478
      %1735 = vst [vmem:[%s203 + $0x7c0] sm:$0xff] %v1479
      %1736 = vst [vmem:[%s203 + $0x7c8] sm:$0xff] %v1480
      %1737 = vst [vmem:[%s203 + $0x7d0] sm:$0xff] %v1481
      %1738 = vst [vmem:[%s203 + $0x7d8] sm:$0xff] %v1482
      %1739 = vst [vmem:[%s203 + $0x7e0] sm:$0xff] %v1483
      %1740 = vst [vmem:[%s203 + $0x7e8] sm:$0xff] %v1484
      %1741 = vst [vmem:[%s203 + $0x7f0] sm:$0xff] %v1485
      %1742 = vst [vmem:[%s203 + $0x7f8] sm:$0xff] %v1486
      %s1743 = smul.u32 32, %s15
      %p1744 = scmp.lt.s32.totalorder %s1743, 63
      %s1745 = scalar_select %p1744, %s1743, 63
      %s1746 = smul.addr %s1745, 8
      %s1747 = smul.addr %s1746, 8
      %s1748 = scalar_lea.vmem %s3, %s1747
      // Predicated region
      $region33: #{background_noise.5} parent=31 // pred_check
        %p1749 = pneg %p106
      $region34: #{background_noise.5} parent=31 // pred_check_branch
        %1751 = sbr.rel (%p1749) target = $region36
      $region35: #{background_noise.5} parent=31 // pred_region
        %s1752 = smul.u32 32, %s15
      $region36: #{background_noise.5} parent=31 // pred_fallthru
        _
    $region32: #{background_noise.5} parent=5 // pred_fallthru
      _
    %p1753 = scmp.le.s32.totalorder 2, %s10
    // Predicated region
    $region37: #{background_noise.5} parent=5 // pred_check
      %p1754 = pneg %p1753
    $region38: #{background_noise.5} parent=5 // pred_check_branch
      %1756 = sbr.rel (%p1754) target = $region40
    $region39: #{background_noise.5} parent=5 // pred_region
      %s1757 = ssub.s32 %s10, 2
      // Predicated region
      $region41: #{background_noise.5} parent=39 // pred_check
        %p1758 = pneg %p112
      $region42: #{background_noise.5} parent=39 // pred_check_branch
        %1760 = sbr.rel (%p1758) target = $region44
      $region43: #{background_noise.5} parent=39 // pred_region
        %s1761 = smul.u32 32, %s16
        %p1762 = scmp.lt.s32.totalorder %s1761, 63
        %s1763 = scalar_select %p1762, %s1761, 63
        %s1764 = smul.addr %s1763, 8
        %s1765 = smul.addr %s1764, 8
        %s1766 = scalar_lea.vmem %s3, %s1765
      $region44: #{background_noise.5} parent=39 // pred_fallthru
        _
    $region40: #{background_noise.5} parent=5 // pred_fallthru
      _
  $region6: #{background_noise.5} parent=0 // loop_footer
    %s14 = sadd.s32 1, %s10
  $region7: #{background_noise.5} parent=0 // loop_footer_branch
    %9 = sbr.rel target = $region3
  $region8: #{background_noise.5} parent=0 // loop_exit
    _

</llo_original>
